<compile_context>
chip_gen: v5e
topology: v5e:2x2
jax: 0.10.0
libtpu: 0.0.40
codegen_flags: <defaults>
</compile_context>

<pallas_src>
import functools

import jax
import jax.numpy as jnp
import numpy as np
from jax import lax
from jax.experimental import pallas as pl
from jax.experimental.pallas import tpu as pltpu

_CPAD = 128  # im2col channel tile: one full lane tile per conv tap


def _convlstm_kernel(xh_ref, c_ref, w_ref, b_ref, h_out_ref, c_out_ref,
                     patch_ref, *, kh, kw, rows, width):
    # xh_ref   : (1, H+kh-1, W+kw-1, 128)  f32   (concat[x,h], zero padded)
    # c_ref    : (1, hid, rows*W)          f32   (NCHW-flattened strip)
    # w_ref    : (kh*kw*128, 4*hid)        bf16
    # b_ref    : (1, 4*hid)                f32
    # h_out    : (1, hid, rows*W)
    # c_out    : (1, hid, rows*W)
    # patch_ref: (rows*W, kh*kw*128)       bf16 scratch (im2col)
    cpad = xh_ref.shape[3]
    hid = c_ref.shape[1]
    s = pl.program_id(1)            # row-strip index
    y0 = s * rows

    # ---- im2col: one lane-aligned 128-wide column block per tap ------------
    # Column order is (ky, kx, c), matching the padded HWIO weight reshape.
    for ky in range(kh):
        for kx in range(kw):
            tap = ky * kw + kx
            win = xh_ref[0, pl.ds(y0 + ky, rows), pl.ds(kx, width), :]
            patch_ref[:, tap * cpad:(tap + 1) * cpad] = (
                win.reshape(rows * width, cpad).astype(patch_ref.dtype))

    # ---- single bf16 MXU matmul (M=rows*W, K=kh*kw*128, N=4*hid), f32 acc --
    acc = jnp.dot(patch_ref[...], w_ref[...],
                  preferred_element_type=jnp.float32) + b_ref[...]

    # One transpose: gates land on sublanes, spatial on (dense) 128 lanes.
    acc_t = acc.T                                  # (4*hid, rows*W)
    sig = jax.nn.sigmoid(acc_t[0:3 * hid, :])      # i | f | o in one EUP pass
    g = jnp.tanh(acc_t[3 * hid:4 * hid, :])
    i = sig[0:hid]
    f = sig[hid:2 * hid]
    o = sig[2 * hid:3 * hid]

    c_cur = c_ref[0].astype(jnp.float32)           # (hid, rows*W)
    c_next = f * c_cur + i * g
    h_next = o * jnp.tanh(c_next)

    h_out_ref[0] = h_next.astype(h_out_ref.dtype)
    c_out_ref[0] = c_next.astype(c_out_ref.dtype)


def _pick_rows_per_step(H, W):
    # Smallest row-strip whose flattened length is a multiple of 128 lanes.
    for r in range(1, H + 1):
        if H % r == 0 and (r * W) % 128 == 0:
            return r
    return H


def convlstm_cell_forward(x_nchw, h_nchw, c_nchw, w_hwio, bias,
                          kernel_size=(3, 3)):
    """ConvLSTMCell.forward: NCHW in / NCHW out (PyTorch convention)."""
    kh, kw = kernel_size
    assert kh % 2 == 1 and kw % 2 == 1, "only odd 'SAME' kernels supported"
    ph, pw = kh // 2, kw // 2
    B, Cx, H, W = x_nchw.shape
    hid = h_nchw.shape[1]
    Cin = Cx + hid
    assert Cin <= _CPAD, "input+hidden channels must fit one lane tile"
    assert w_hwio.shape == (kh, kw, Cin, 4 * hid)
    R = _pick_rows_per_step(H, W)

    # ---- layout plumbing (wrapper side) ------------------------------------
    # concat([x, h]) + SAME spatial zero pad + channel pad to 128: the kernel
    # input is a fully lane-dense f32 slab (contiguous DMA, no in-kernel pad).
    xh = jnp.concatenate([x_nchw, h_nchw], axis=1)            # (B, Cin, H, W)
    xh = jnp.transpose(xh, (0, 2, 3, 1))                      # (B, H, W, Cin)
    xh = jnp.pad(xh, ((0, 0), (ph, ph), (pw, pw), (0, _CPAD - Cin)))
    c2d = c_nchw.reshape(B, hid, H * W)                       # free reshape

    # Weights: zero-pad the input-channel axis to 128 and flatten to the
    # (kh*kw*128, 4*hid) im2col layout; bf16 operands for the MXU.
    w_pad = jnp.pad(w_hwio, ((0, 0), (0, 0), (0, _CPAD - Cin), (0, 0)))
    w2d = w_pad.reshape(kh * kw * _CPAD, 4 * hid).astype(jnp.bfloat16)
    b2d = bias.reshape(1, 4 * hid).astype(jnp.float32)

    kernel = functools.partial(_convlstm_kernel, kh=kh, kw=kw, rows=R, width=W)

    h_next, c_next = pl.pallas_call(
        kernel,
        out_shape=(
            jax.ShapeDtypeStruct((B, hid, H * W), x_nchw.dtype),
            jax.ShapeDtypeStruct((B, hid, H * W), x_nchw.dtype),
        ),
        grid_spec=pltpu.PrefetchScalarGridSpec(
            num_scalar_prefetch=0,
            grid=(B, H // R),
            in_specs=[
                # Padded input slab: constant across the strip axis (fetched
                # once per batch element, reused by every strip).
                pl.BlockSpec((1, H + 2 * ph, W + 2 * pw, _CPAD),
                             lambda b, s: (b, 0, 0, 0)),
                pl.BlockSpec((1, hid, R * W), lambda b, s: (b, 0, s)),
                # Weights / bias are grid-invariant (constant index_map).
                pl.BlockSpec((kh * kw * _CPAD, 4 * hid), lambda b, s: (0, 0)),
                pl.BlockSpec((1, 4 * hid), lambda b, s: (0, 0)),
            ],
            out_specs=[
                pl.BlockSpec((1, hid, R * W), lambda b, s: (b, 0, s)),
                pl.BlockSpec((1, hid, R * W), lambda b, s: (b, 0, s)),
            ],
            scratch_shapes=[
                pltpu.VMEM((R * W, kh * kw * _CPAD), jnp.bfloat16),
            ],
        ),
        compiler_params=pltpu.CompilerParams(
            dimension_semantics=("parallel", "parallel")),
    )(xh, c2d, w2d, b2d)

    # (B, hid, H*W) is already NCHW order: reshapes below are free.
    return (h_next.reshape(B, hid, H, W), c_next.reshape(B, hid, H, W))


# ----------------------------------------------------------------------------
# Pure-JAX f32 reference (same math, lax conv) for validation.
# ----------------------------------------------------------------------------
def convlstm_cell_reference(x_nchw, h_nchw, c_nchw, w_hwio, bias):
    x = jnp.transpose(x_nchw, (0, 2, 3, 1))
    h = jnp.transpose(h_nchw, (0, 2, 3, 1))
    c = jnp.transpose(c_nchw, (0, 2, 3, 1))
    combined = jnp.concatenate([x, h], axis=-1)
    conv = lax.conv_general_dilated(
        combined, w_hwio, window_strides=(1, 1), padding="SAME",
        dimension_numbers=("NHWC", "HWIO", "NHWC"),
        precision=lax.Precision.HIGHEST)
    conv = conv + bias[None, None, None, :]
    cc_i, cc_f, cc_o, cc_g = jnp.split(conv, 4, axis=-1)
    i = jax.nn.sigmoid(cc_i)
    f = jax.nn.sigmoid(cc_f)
    o = jax.nn.sigmoid(cc_o)
    g = jnp.tanh(cc_g)
    c_next = f * c + i * g
    h_next = o * jnp.tanh(c_next)
    return (jnp.transpose(h_next, (0, 3, 1, 2)),
            jnp.transpose(c_next, (0, 3, 1, 2)))


if __name__ == "__main__":
    batch = 2
    input_dim = 4
    hidden_dim = 32
    H = W = 16
    kh, kw = 3, 3
    Cin = input_dim + hidden_dim

    key = jax.random.PRNGKey(0)
    k_x, k_h, k_c, k_w, k_b = jax.random.split(key, 5)

    x = jax.random.normal(k_x, (batch, input_dim, H, W), jnp.float32)
    h0 = jax.random.normal(k_h, (batch, hidden_dim, H, W), jnp.float32)
    c0 = jax.random.normal(k_c, (batch, hidden_dim, H, W), jnp.float32)

    # Deterministic Conv2d-style init (4*hidden out, Cin in, 3x3 kernel).
    fan_in = Cin * kh * kw
    bound = 1.0 / np.sqrt(fan_in)
    w_hwio = jax.random.uniform(
        k_w, (kh, kw, Cin, 4 * hidden_dim), jnp.float32, -bound, bound)
    bias = jax.random.uniform(
        k_b, (4 * hidden_dim,), jnp.float32, -bound, bound)

    h_next, c_next = jax.jit(convlstm_cell_forward)(x, h0, c0, w_hwio, bias)
    jax.block_until_ready((h_next, c_next))

    h_want, c_want = convlstm_cell_reference(x, h0, c0, w_hwio, bias)
    # Tolerance accounts for bf16 MXU operands; the reference conv is f32
    # HIGHEST precision.
    np.testing.assert_allclose(np.asarray(h_next), np.asarray(h_want),
                               rtol=3e-2, atol=3e-2)
    np.testing.assert_allclose(np.asarray(c_next), np.asarray(c_want),
                               rtol=3e-2, atol=3e-2)

    print("KERNEL_OK")
</pallas_src>

<mosaic_0001>
module attributes {stable_mosaic.version = 11 : i64} {
  func.func @_convlstm_kernel(%arg0: i32, %arg1: i32, %arg2: memref<1x18x18x128xf32, #tpu.memory_space<vmem>>, %arg3: memref<1x32x128xf32, #tpu.memory_space<vmem>>, %arg4: memref<1152x128xbf16, #tpu.memory_space<vmem>>, %arg5: memref<1x128xf32, #tpu.memory_space<vmem>>, %arg6: memref<1x32x128xf32, #tpu.memory_space<vmem>>, %arg7: memref<1x32x128xf32, #tpu.memory_space<vmem>>, %arg8: memref<128x1152xbf16, #tpu.memory_space<vmem>>) attributes {dimension_semantics = [#tpu.dimension_semantics<parallel>, #tpu.dimension_semantics<parallel>], iteration_bounds = array<i64: 2, 2>, scalar_prefetch = 0 : i64, scratch_operands = 1 : i64, tpu.core_type = #tpu.core_type<tc>, window_params = [{transform_indices = @transform_0, window_bounds = array<i64: 1, 18, 18, 128>}, {transform_indices = @transform_1, window_bounds = array<i64: 1, 32, 128>}, {pipeline_mode = #tpu.pipeline_mode<synchronous>, transform_indices = @transform_2, window_bounds = array<i64: 1152, 128>}, {pipeline_mode = #tpu.pipeline_mode<synchronous>, transform_indices = @transform_3, window_bounds = array<i64: 1, 128>}, {transform_indices = @transform_4, window_bounds = array<i64: 1, 32, 128>}, {transform_indices = @transform_5, window_bounds = array<i64: 1, 32, 128>}]} {
    %c8_i32 = arith.constant 8 : i32
    %0 = arith.muli %arg1, %c8_i32 : i32
    %c0_i32 = arith.constant 0 : i32
    %1 = arith.addi %0, %c0_i32 : i32
    %c0 = arith.constant 0 : index
    %2 = arith.index_cast %1 : i32 to index
    %c0_0 = arith.constant 0 : index
    %c0_1 = arith.constant 0 : index
    %3 = vector.load %arg2[%c0, %2, %c0_0, %c0_1] : memref<1x18x18x128xf32, #tpu.memory_space<vmem>>, vector<1x8x16x128xf32>
    %4 = vector.shape_cast %3 : vector<1x8x16x128xf32> to vector<8x16x128xf32>
    %5 = vector.shape_cast %4 : vector<8x16x128xf32> to vector<128x128xf32>
    %6 = arith.truncf %5 : vector<128x128xf32> to vector<128x128xbf16>
    %c0_2 = arith.constant 0 : index
    %c0_3 = arith.constant 0 : index
    %7 = vector.load %arg8[%c0_2, %c0_3] : memref<128x1152xbf16, #tpu.memory_space<vmem>>, vector<128x128xbf16>
    tpu.vector_store %arg8[%c0_2, %c0_3], %6 {strides = array<i32>} : memref<128x1152xbf16, #tpu.memory_space<vmem>>, vector<128x128xbf16>,
    %c0_i32_4 = arith.constant 0 : i32
    %8 = arith.addi %0, %c0_i32_4 : i32
    %c0_5 = arith.constant 0 : index
    %9 = arith.index_cast %8 : i32 to index
    %c1 = arith.constant 1 : index
    %c0_6 = arith.constant 0 : index
    %10 = vector.load %arg2[%c0_5, %9, %c1, %c0_6] : memref<1x18x18x128xf32, #tpu.memory_space<vmem>>, vector<1x8x16x128xf32>
    %11 = vector.shape_cast %10 : vector<1x8x16x128xf32> to vector<8x16x128xf32>
    %12 = vector.shape_cast %11 : vector<8x16x128xf32> to vector<128x128xf32>
    %13 = arith.truncf %12 : vector<128x128xf32> to vector<128x128xbf16>
    %c0_7 = arith.constant 0 : index
    %c128 = arith.constant 128 : index
    %14 = vector.load %arg8[%c0_7, %c128] : memref<128x1152xbf16, #tpu.memory_space<vmem>>, vector<128x128xbf16>
    tpu.vector_store %arg8[%c0_7, %c128], %13 {strides = array<i32>} : memref<128x1152xbf16, #tpu.memory_space<vmem>>, vector<128x128xbf16>,
    %c0_i32_8 = arith.constant 0 : i32
    %15 = arith.addi %0, %c0_i32_8 : i32
    %c0_9 = arith.constant 0 : index
    %16 = arith.index_cast %15 : i32 to index
    %c2 = arith.constant 2 : index
    %c0_10 = arith.constant 0 : index
    %17 = vector.load %arg2[%c0_9, %16, %c2, %c0_10] : memref<1x18x18x128xf32, #tpu.memory_space<vmem>>, vector<1x8x16x128xf32>
    %18 = vector.shape_cast %17 : vector<1x8x16x128xf32> to vector<8x16x128xf32>
    %19 = vector.shape_cast %18 : vector<8x16x128xf32> to vector<128x128xf32>
    %20 = arith.truncf %19 : vector<128x128xf32> to vector<128x128xbf16>
    %c0_11 = arith.constant 0 : index
    %c256 = arith.constant 256 : index
    %21 = vector.load %arg8[%c0_11, %c256] : memref<128x1152xbf16, #tpu.memory_space<vmem>>, vector<128x128xbf16>
    tpu.vector_store %arg8[%c0_11, %c256], %20 {strides = array<i32>} : memref<128x1152xbf16, #tpu.memory_space<vmem>>, vector<128x128xbf16>,
    %c1_i32 = arith.constant 1 : i32
    %22 = arith.addi %0, %c1_i32 : i32
    %c0_12 = arith.constant 0 : index
    %23 = arith.index_cast %22 : i32 to index
    %c0_13 = arith.constant 0 : index
    %c0_14 = arith.constant 0 : index
    %24 = vector.load %arg2[%c0_12, %23, %c0_13, %c0_14] : memref<1x18x18x128xf32, #tpu.memory_space<vmem>>, vector<1x8x16x128xf32>
    %25 = vector.shape_cast %24 : vector<1x8x16x128xf32> to vector<8x16x128xf32>
    %26 = vector.shape_cast %25 : vector<8x16x128xf32> to vector<128x128xf32>
    %27 = arith.truncf %26 : vector<128x128xf32> to vector<128x128xbf16>
    %c0_15 = arith.constant 0 : index
    %c384 = arith.constant 384 : index
    %28 = vector.load %arg8[%c0_15, %c384] : memref<128x1152xbf16, #tpu.memory_space<vmem>>, vector<128x128xbf16>
    tpu.vector_store %arg8[%c0_15, %c384], %27 {strides = array<i32>} : memref<128x1152xbf16, #tpu.memory_space<vmem>>, vector<128x128xbf16>,
    %c1_i32_16 = arith.constant 1 : i32
    %29 = arith.addi %0, %c1_i32_16 : i32
    %c0_17 = arith.constant 0 : index
    %30 = arith.index_cast %29 : i32 to index
    %c1_18 = arith.constant 1 : index
    %c0_19 = arith.constant 0 : index
    %31 = vector.load %arg2[%c0_17, %30, %c1_18, %c0_19] : memref<1x18x18x128xf32, #tpu.memory_space<vmem>>, vector<1x8x16x128xf32>
    %32 = vector.shape_cast %31 : vector<1x8x16x128xf32> to vector<8x16x128xf32>
    %33 = vector.shape_cast %32 : vector<8x16x128xf32> to vector<128x128xf32>
    %34 = arith.truncf %33 : vector<128x128xf32> to vector<128x128xbf16>
    %c0_20 = arith.constant 0 : index
    %c512 = arith.constant 512 : index
    %35 = vector.load %arg8[%c0_20, %c512] : memref<128x1152xbf16, #tpu.memory_space<vmem>>, vector<128x128xbf16>
    tpu.vector_store %arg8[%c0_20, %c512], %34 {strides = array<i32>} : memref<128x1152xbf16, #tpu.memory_space<vmem>>, vector<128x128xbf16>,
    %c1_i32_21 = arith.constant 1 : i32
    %36 = arith.addi %0, %c1_i32_21 : i32
    %c0_22 = arith.constant 0 : index
    %37 = arith.index_cast %36 : i32 to index
    %c2_23 = arith.constant 2 : index
    %c0_24 = arith.constant 0 : index
    %38 = vector.load %arg2[%c0_22, %37, %c2_23, %c0_24] : memref<1x18x18x128xf32, #tpu.memory_space<vmem>>, vector<1x8x16x128xf32>
    %39 = vector.shape_cast %38 : vector<1x8x16x128xf32> to vector<8x16x128xf32>
    %40 = vector.shape_cast %39 : vector<8x16x128xf32> to vector<128x128xf32>
    %41 = arith.truncf %40 : vector<128x128xf32> to vector<128x128xbf16>
    %c0_25 = arith.constant 0 : index
    %c640 = arith.constant 640 : index
    %42 = vector.load %arg8[%c0_25, %c640] : memref<128x1152xbf16, #tpu.memory_space<vmem>>, vector<128x128xbf16>
    tpu.vector_store %arg8[%c0_25, %c640], %41 {strides = array<i32>} : memref<128x1152xbf16, #tpu.memory_space<vmem>>, vector<128x128xbf16>,
    %c2_i32 = arith.constant 2 : i32
    %43 = arith.addi %0, %c2_i32 : i32
    %c0_26 = arith.constant 0 : index
    %44 = arith.index_cast %43 : i32 to index
    %c0_27 = arith.constant 0 : index
    %c0_28 = arith.constant 0 : index
    %45 = vector.load %arg2[%c0_26, %44, %c0_27, %c0_28] : memref<1x18x18x128xf32, #tpu.memory_space<vmem>>, vector<1x8x16x128xf32>
    %46 = vector.shape_cast %45 : vector<1x8x16x128xf32> to vector<8x16x128xf32>
    %47 = vector.shape_cast %46 : vector<8x16x128xf32> to vector<128x128xf32>
    %48 = arith.truncf %47 : vector<128x128xf32> to vector<128x128xbf16>
    %c0_29 = arith.constant 0 : index
    %c768 = arith.constant 768 : index
    %49 = vector.load %arg8[%c0_29, %c768] : memref<128x1152xbf16, #tpu.memory_space<vmem>>, vector<128x128xbf16>
    tpu.vector_store %arg8[%c0_29, %c768], %48 {strides = array<i32>} : memref<128x1152xbf16, #tpu.memory_space<vmem>>, vector<128x128xbf16>,
    %c2_i32_30 = arith.constant 2 : i32
    %50 = arith.addi %0, %c2_i32_30 : i32
    %c0_31 = arith.constant 0 : index
    %51 = arith.index_cast %50 : i32 to index
    %c1_32 = arith.constant 1 : index
    %c0_33 = arith.constant 0 : index
    %52 = vector.load %arg2[%c0_31, %51, %c1_32, %c0_33] : memref<1x18x18x128xf32, #tpu.memory_space<vmem>>, vector<1x8x16x128xf32>
    %53 = vector.shape_cast %52 : vector<1x8x16x128xf32> to vector<8x16x128xf32>
    %54 = vector.shape_cast %53 : vector<8x16x128xf32> to vector<128x128xf32>
    %55 = arith.truncf %54 : vector<128x128xf32> to vector<128x128xbf16>
    %c0_34 = arith.constant 0 : index
    %c896 = arith.constant 896 : index
    %56 = vector.load %arg8[%c0_34, %c896] : memref<128x1152xbf16, #tpu.memory_space<vmem>>, vector<128x128xbf16>
    tpu.vector_store %arg8[%c0_34, %c896], %55 {strides = array<i32>} : memref<128x1152xbf16, #tpu.memory_space<vmem>>, vector<128x128xbf16>,
    %c2_i32_35 = arith.constant 2 : i32
    %57 = arith.addi %0, %c2_i32_35 : i32
    %c0_36 = arith.constant 0 : index
    %58 = arith.index_cast %57 : i32 to index
    %c2_37 = arith.constant 2 : index
    %c0_38 = arith.constant 0 : index
    %59 = vector.load %arg2[%c0_36, %58, %c2_37, %c0_38] : memref<1x18x18x128xf32, #tpu.memory_space<vmem>>, vector<1x8x16x128xf32>
    %60 = vector.shape_cast %59 : vector<1x8x16x128xf32> to vector<8x16x128xf32>
    %61 = vector.shape_cast %60 : vector<8x16x128xf32> to vector<128x128xf32>
    %62 = arith.truncf %61 : vector<128x128xf32> to vector<128x128xbf16>
    %c0_39 = arith.constant 0 : index
    %c1024 = arith.constant 1024 : index
    %63 = vector.load %arg8[%c0_39, %c1024] : memref<128x1152xbf16, #tpu.memory_space<vmem>>, vector<128x128xbf16>
    tpu.vector_store %arg8[%c0_39, %c1024], %62 {strides = array<i32>} : memref<128x1152xbf16, #tpu.memory_space<vmem>>, vector<128x128xbf16>,
    %c0_40 = arith.constant 0 : index
    %c0_41 = arith.constant 0 : index
    %64 = vector.load %arg8[%c0_40, %c0_41] : memref<128x1152xbf16, #tpu.memory_space<vmem>>, vector<128x1152xbf16>
    %c0_42 = arith.constant 0 : index
    %c0_43 = arith.constant 0 : index
    %65 = vector.load %arg4[%c0_42, %c0_43] : memref<1152x128xbf16, #tpu.memory_space<vmem>>, vector<1152x128xbf16>
    %cst = arith.constant dense<0.000000e+00> : vector<128x128xf32>
    %66 = tpu.matmul %64, %65, %cst {dimension_numbers = #tpu.dot_dimension_numbers<[1], [0], [0], [1], [0, 0, 1, 1], [], []>} : vector<128x1152xbf16>, vector<1152x128xbf16>, vector<128x128xf32> -> vector<128x128xf32>
    %c0_44 = arith.constant 0 : index
    %c0_45 = arith.constant 0 : index
    %67 = vector.load %arg5[%c0_44, %c0_45] : memref<1x128xf32, #tpu.memory_space<vmem>>, vector<1x128xf32>
    %68 = vector.broadcast %67 : vector<1x128xf32> to vector<128x128xf32>
    %69 = arith.addf %66, %68 : vector<128x128xf32>
    %70 = tpu.transpose %69, [1, 0] : vector<128x128xf32> -> vector<128x128xf32>
    %71 = vector.extract_strided_slice %70 {offsets = [0, 0], sizes = [96, 128], strides = [1, 1]} : vector<128x128xf32> to vector<96x128xf32>
    %72 = arith.negf %71 : vector<96x128xf32>
    %73 = math.exp %72 : vector<96x128xf32>
    %cst_46 = arith.constant 1.000000e+00 : f32
    %74 = vector.broadcast %cst_46 : f32 to vector<96x128xf32>
    %75 = arith.addf %74, %73 : vector<96x128xf32>
    %76 = arith.divf %74, %75 : vector<96x128xf32>
    %77 = vector.extract_strided_slice %70 {offsets = [96, 0], sizes = [32, 128], strides = [1, 1]} : vector<128x128xf32> to vector<32x128xf32>
    %78 = math.tanh %77 : vector<32x128xf32>
    %79 = vector.extract_strided_slice %76 {offsets = [0, 0], sizes = [32, 128], strides = [1, 1]} : vector<96x128xf32> to vector<32x128xf32>
    %80 = vector.extract_strided_slice %76 {offsets = [32, 0], sizes = [32, 128], strides = [1, 1]} : vector<96x128xf32> to vector<32x128xf32>
    %81 = vector.extract_strided_slice %76 {offsets = [64, 0], sizes = [32, 128], strides = [1, 1]} : vector<96x128xf32> to vector<32x128xf32>
    %c0_47 = arith.constant 0 : index
    %c0_48 = arith.constant 0 : index
    %c0_49 = arith.constant 0 : index
    %82 = vector.load %arg3[%c0_47, %c0_48, %c0_49] : memref<1x32x128xf32, #tpu.memory_space<vmem>>, vector<1x32x128xf32>
    %83 = vector.shape_cast %82 : vector<1x32x128xf32> to vector<32x128xf32>
    %84 = arith.mulf %80, %83 : vector<32x128xf32>
    %85 = arith.mulf %79, %78 : vector<32x128xf32>
    %86 = arith.addf %84, %85 : vector<32x128xf32>
    %87 = math.tanh %86 : vector<32x128xf32>
    %88 = arith.mulf %81, %87 : vector<32x128xf32>
    %c0_50 = arith.constant 0 : index
    %c0_51 = arith.constant 0 : index
    %c0_52 = arith.constant 0 : index
    %89 = vector.load %arg6[%c0_50, %c0_51, %c0_52] : memref<1x32x128xf32, #tpu.memory_space<vmem>>, vector<1x32x128xf32>
    %90 = vector.shape_cast %89 : vector<1x32x128xf32> to vector<32x128xf32>
    %91 = vector.shape_cast %88 : vector<32x128xf32> to vector<1x32x128xf32>
    tpu.vector_store %arg6[%c0_50, %c0_51, %c0_52], %91 {strides = array<i32>} : memref<1x32x128xf32, #tpu.memory_space<vmem>>, vector<1x32x128xf32>,
    %c0_53 = arith.constant 0 : index
    %c0_54 = arith.constant 0 : index
    %c0_55 = arith.constant 0 : index
    %92 = vector.load %arg7[%c0_53, %c0_54, %c0_55] : memref<1x32x128xf32, #tpu.memory_space<vmem>>, vector<1x32x128xf32>
    %93 = vector.shape_cast %92 : vector<1x32x128xf32> to vector<32x128xf32>
    %94 = vector.shape_cast %86 : vector<32x128xf32> to vector<1x32x128xf32>
    tpu.vector_store %arg7[%c0_53, %c0_54, %c0_55], %94 {strides = array<i32>} : memref<1x32x128xf32, #tpu.memory_space<vmem>>, vector<1x32x128xf32>,
    return
  }
  func.func @transform_0(%arg0: i32, %arg1: i32) -> (i32, i32, i32, i32) {
    %c0_i32 = arith.constant 0 : i32
    %c0_i32_0 = arith.constant 0 : i32
    %c0_i32_1 = arith.constant 0 : i32
    %c0_i32_2 = arith.constant 0 : i32
    return %arg0, %c0_i32, %c0_i32_0, %c0_i32_1 : i32, i32, i32, i32
  }
  func.func @transform_1(%arg0: i32, %arg1: i32) -> (i32, i32, i32) {
    %c0_i32 = arith.constant 0 : i32
    %c0_i32_0 = arith.constant 0 : i32
    return %arg0, %c0_i32, %arg1 : i32, i32, i32
  }
  func.func @transform_2(%arg0: i32, %arg1: i32) -> (i32, i32) {
    %c0_i32 = arith.constant 0 : i32
    %c0_i32_0 = arith.constant 0 : i32
    %c0_i32_1 = arith.constant 0 : i32
    return %c0_i32, %c0_i32_0 : i32, i32
  }
  func.func @transform_3(%arg0: i32, %arg1: i32) -> (i32, i32) {
    %c0_i32 = arith.constant 0 : i32
    %c0_i32_0 = arith.constant 0 : i32
    %c0_i32_1 = arith.constant 0 : i32
    return %c0_i32, %c0_i32_0 : i32, i32
  }
  func.func @transform_4(%arg0: i32, %arg1: i32) -> (i32, i32, i32) {
    %c0_i32 = arith.constant 0 : i32
    %c0_i32_0 = arith.constant 0 : i32
    return %arg0, %c0_i32, %arg1 : i32, i32, i32
  }
  func.func @transform_5(%arg0: i32, %arg1: i32) -> (i32, i32, i32) {
    %c0_i32 = arith.constant 0 : i32
    %c0_i32_0 = arith.constant 0 : i32
    return %arg0, %c0_i32, %arg1 : i32, i32, i32
  }
}

</mosaic_0001>

<llo_original>
// kernel: convlstm_cell_forward.1
$region0: #{convlstm_cell_forward.1}
  #allocation0 [shape = 'u32[]', space=smem, size = 0x4, offset = 0x4, fixed_abs, tag = 'smem constant byte address 0x4 - core index']
  #allocation1 [shape = 'u32[72,128]{1,0:T(1,128)}', space=vmem, size = 0x9000, scoped, tag = 'internal scratch']
  #allocation2 [shape = 'bf16[128,1152]{1,0:T(8,128)(2,1)}', space=vmem, size = 0x48000, scoped, tag = 'scratch operand']
  %s0 = inlined_call_operand.vmem [shape: f32[2,18,18,128], index: 0, kind: input, shape index: {}]
  %s1 = inlined_call_operand.vmem [shape: f32[2,32,256], index: 1, kind: input, shape index: {}]
  %s2 = inlined_call_operand.vmem [shape: bf16[1152,128], index: 2, kind: input, shape index: {}]
  %s3 = inlined_call_operand.vmem [shape: f32[1,128], index: 3, kind: input, shape index: {}]
  %s4 = inlined_call_operand.vmem [shape: f32[2,32,256], index: 4, kind: output, shape index: {0}]
  %s5 = inlined_call_operand.vmem [shape: f32[2,32,256], index: 5, kind: output, shape index: {1}]
  %6 = xla_tuple %s4, %s5
  %s7 = sld [smem:[#allocation0]]
  $region163: #{convlstm_cell_forward.1} parent=0
    _
  %s9 = ssub.s32 1, %s7
  %s10 = scalar_select 0, %s9, %s7
  $region1: #{convlstm_cell_forward.1} parent=0
    #allocation3 [shape = 'u8[32768]{0}', space=vmem, size = 0x8000, scoped, tag = 'input window, operand 1']
    #allocation4 [shape = 'u8[32768]{0}', space=vmem, size = 0x8000, scoped, tag = 'output window, operand 0']
    #allocation5 [shape = 'u8[32768]{0}', space=vmem, size = 0x8000, scoped, tag = 'output window, operand 1']
    loop: start=0, step=1, limit=6
    $region2: #{convlstm_cell_forward.1} parent=1 // loop_pre_header
      _
    $region3: #{convlstm_cell_forward.1} parent=1 // loop_header
      %s12 = sphi 0, %s16
      %p13 = scmp.ge.s32.totalorder %s12, 6
      %s19 = sphi 0, %s31
      %s20 = sphi 0, %s27
      %s21 = sphi 0, %s19
      %s22 = sphi 0, %s20
      %s23 = sphi 0, %s21
      %s24 = sphi 0, %s22
      %s34 = sphi 0, %s36
      %s37 = sphi 0, %s34
      %s38 = sphi 0, %s37
      %s54 = sphi 0, %s38
      %s62 = sphi 0, %s64
      %s65 = sphi 0, %s62
      %s66 = sphi 0, %s65
      %s82 = sphi 0, %s66
      %s86 = sphi 0, %s86
      %s88 = sphi 0, %s86
      %s89 = sphi 0, %s88
      %s103 = sphi 0, %s89
      %s107 = sphi 0, %s107
      %s109 = sphi 0, %s107
      %s110 = sphi 0, %s109
      %s124 = sphi 0, %s110
      %s132 = sphi 0, %s134
      %s135 = sphi 0, %s132
      %s136 = sphi 0, %s135
      %s152 = sphi 0, %s136
      %s160 = sphi 0, %s162
      %s163 = sphi 0, %s160
      %s164 = sphi 0, %s163
      %s180 = sphi 0, %s164
    $region4: #{convlstm_cell_forward.1} parent=1 // loop_header_branch
      %15 = sbr.rel (%p13) target = $region8
    $region5: #{convlstm_cell_forward.1} parent=1 // loop_body
      %s17 = ssub.s32 %s12, 1
      %s18 = ssub.s32 %s12, 2
      %s25 = sadd.s32 1, %s20
      %p26 = scmp.ge.s32.totalorder %s25, 2
      %s27 = scalar_select %p26, 0, %s25
      %s28 = sadd.s32 1, %s19
      %s29 = scalar_select %p26, %s28, %s19
      %p30 = scmp.ge.s32.totalorder %s29, 2
      %s31 = scalar_select %p30, 0, %s29
      %s32 = ssub.s32 %s19, %s31
      %p33 = scmp.eq.s32.totalorder %s32, 0
      %s35 = sadd.s32 %s34, 1
      %s36 = scalar_select %p33, %s34, %s35
      %p39 = pneg %p33
      %p40 = scmp.eq.s32.totalorder %s12, 3
      %p41 = por %p39, %p40
      %p42 = scmp.ne.s32.totalorder %s34, %s37
      %p43 = scmp.eq.s32.totalorder %s12, 0
      %p44 = por %p42, %p43
      %p45 = scmp.ne.s32.totalorder %s34, %s37
      %p46 = scmp.eq.s32.totalorder %s17, 3
      %p47 = por %p45, %p46
      %p48 = scmp.ne.s32.totalorder %s37, %s38
      %p49 = scmp.eq.s32.totalorder %s17, 0
      %p50 = por %p48, %p49
      %p51 = scmp.ne.s32.totalorder %s37, %s38
      %p52 = scmp.eq.s32.totalorder %s18, 3
      %p53 = por %p51, %p52
      %p55 = scmp.ne.s32.totalorder %s38, %s54
      %p56 = scmp.eq.s32.totalorder %s18, 0
      %p57 = por %p55, %p56
      %s58 = ssub.s32 %s19, %s31
      %s59 = ssub.s32 %s20, %s27
      %s60 = sor.u32 %s58, %s59
      %p61 = scmp.eq.s32.totalorder %s60, 0
      %s63 = sadd.s32 %s62, 1
      %s64 = scalar_select %p61, %s62, %s63
      %p67 = pneg %p61
      %p68 = scmp.eq.s32.totalorder %s12, 3
      %p69 = por %p67, %p68
      %p70 = scmp.ne.s32.totalorder %s62, %s65
      %p71 = scmp.eq.s32.totalorder %s12, 0
      %p72 = por %p70, %p71
      %p73 = scmp.ne.s32.totalorder %s62, %s65
      %p74 = scmp.eq.s32.totalorder %s17, 3
      %p75 = por %p73, %p74
      %p76 = scmp.ne.s32.totalorder %s65, %s66
      %p77 = scmp.eq.s32.totalorder %s17, 0
      %p78 = por %p76, %p77
      %p79 = scmp.ne.s32.totalorder %s65, %s66
      %p80 = scmp.eq.s32.totalorder %s18, 3
      %p81 = por %p79, %p80
      %p83 = scmp.ne.s32.totalorder %s66, %s82
      %p84 = scmp.eq.s32.totalorder %s18, 0
      %p85 = por %p83, %p84
      %s87 = sadd.s32 %s86, 1
      %p90 = scmp.eq.s32.totalorder %s12, 3
      %p91 = scmp.ne.s32.totalorder %s86, %s88
      %p92 = scmp.eq.s32.totalorder %s12, 0
      %p93 = por %p91, %p92
      %p94 = scmp.ne.s32.totalorder %s86, %s88
      %p95 = scmp.eq.s32.totalorder %s17, 3
      %p96 = por %p94, %p95
      %p97 = scmp.ne.s32.totalorder %s88, %s89
      %p98 = scmp.eq.s32.totalorder %s17, 0
      %p99 = por %p97, %p98
      %p100 = scmp.ne.s32.totalorder %s88, %s89
      %p101 = scmp.eq.s32.totalorder %s18, 3
      %p102 = por %p100, %p101
      %p104 = scmp.ne.s32.totalorder %s89, %s103
      %p105 = scmp.eq.s32.totalorder %s18, 0
      %p106 = por %p104, %p105
      %s108 = sadd.s32 %s107, 1
      %p111 = scmp.eq.s32.totalorder %s12, 3
      %p112 = scmp.ne.s32.totalorder %s107, %s109
      %p113 = scmp.eq.s32.totalorder %s12, 0
      %p114 = por %p112, %p113
      %p115 = scmp.ne.s32.totalorder %s107, %s109
      %p116 = scmp.eq.s32.totalorder %s17, 3
      %p117 = por %p115, %p116
      %p118 = scmp.ne.s32.totalorder %s109, %s110
      %p119 = scmp.eq.s32.totalorder %s17, 0
      %p120 = por %p118, %p119
      %p121 = scmp.ne.s32.totalorder %s109, %s110
      %p122 = scmp.eq.s32.totalorder %s18, 3
      %p123 = por %p121, %p122
      %p125 = scmp.ne.s32.totalorder %s110, %s124
      %p126 = scmp.eq.s32.totalorder %s18, 0
      %p127 = por %p125, %p126
      %s128 = ssub.s32 %s19, %s31
      %s129 = ssub.s32 %s20, %s27
      %s130 = sor.u32 %s128, %s129
      %p131 = scmp.eq.s32.totalorder %s130, 0
      %s133 = sadd.s32 %s132, 1
      %s134 = scalar_select %p131, %s132, %s133
      %p137 = pneg %p131
      %p138 = scmp.eq.s32.totalorder %s12, 3
      %p139 = por %p137, %p138
      %p140 = scmp.ne.s32.totalorder %s132, %s135
      %p141 = scmp.eq.s32.totalorder %s12, 0
      %p142 = por %p140, %p141
      %p143 = scmp.ne.s32.totalorder %s132, %s135
      %p144 = scmp.eq.s32.totalorder %s17, 3
      %p145 = por %p143, %p144
      %p146 = scmp.ne.s32.totalorder %s135, %s136
      %p147 = scmp.eq.s32.totalorder %s17, 0
      %p148 = por %p146, %p147
      %p149 = scmp.ne.s32.totalorder %s135, %s136
      %p150 = scmp.eq.s32.totalorder %s18, 3
      %p151 = por %p149, %p150
      %p153 = scmp.ne.s32.totalorder %s136, %s152
      %p154 = scmp.eq.s32.totalorder %s18, 0
      %p155 = por %p153, %p154
      %s156 = ssub.s32 %s19, %s31
      %s157 = ssub.s32 %s20, %s27
      %s158 = sor.u32 %s156, %s157
      %p159 = scmp.eq.s32.totalorder %s158, 0
      %s161 = sadd.s32 %s160, 1
      %s162 = scalar_select %p159, %s160, %s161
      %p165 = pneg %p159
      %p166 = scmp.eq.s32.totalorder %s12, 3
      %p167 = por %p165, %p166
      %p168 = scmp.ne.s32.totalorder %s160, %s163
      %p169 = scmp.eq.s32.totalorder %s12, 0
      %p170 = por %p168, %p169
      %p171 = scmp.ne.s32.totalorder %s160, %s163
      %p172 = scmp.eq.s32.totalorder %s17, 3
      %p173 = por %p171, %p172
      %p174 = scmp.ne.s32.totalorder %s163, %s164
      %p175 = scmp.eq.s32.totalorder %s17, 0
      %p176 = por %p174, %p175
      %p177 = scmp.ne.s32.totalorder %s163, %s164
      %p178 = scmp.eq.s32.totalorder %s18, 3
      %p179 = por %p177, %p178
      %p181 = scmp.ne.s32.totalorder %s164, %s180
      %p182 = scmp.eq.s32.totalorder %s18, 0
      %p183 = por %p181, %p182
      %p184 = scmp.le.s32.totalorder 1, %s12
      %p185 = scmp.lt.s32.totalorder %s12, 5
      %p186 = pnand %p184, %p185
      %p187 = pneg %p186
      // Predicated region
      $region9: #{convlstm_cell_forward.1} parent=5 // pred_check
        _
      $region10: #{convlstm_cell_forward.1} parent=5 // pred_check_branch
        %189 = sbr.rel (%p186) target = $region12
      $region11: #{convlstm_cell_forward.1} parent=5 // pred_region
        %s190 = ssub.s32 %s12, 1
        // Predicated region
        $region13: #{convlstm_cell_forward.1} parent=11 // pred_check
          %p191 = pneg %p99
        $region14: #{convlstm_cell_forward.1} parent=11 // pred_check_branch
          %193 = sbr.rel (%p191) target = $region16
        $region15: #{convlstm_cell_forward.1} parent=11 // pred_region
          _
        $region16: #{convlstm_cell_forward.1} parent=11 // pred_fallthru
          _
        // Predicated region
        $region17: #{convlstm_cell_forward.1} parent=11 // pred_check
          %p194 = pneg %p120
        $region18: #{convlstm_cell_forward.1} parent=11 // pred_check_branch
          %196 = sbr.rel (%p194) target = $region20
        $region19: #{convlstm_cell_forward.1} parent=11 // pred_region
          _
        $region20: #{convlstm_cell_forward.1} parent=11 // pred_fallthru
          _
      $region12: #{convlstm_cell_forward.1} parent=5 // pred_fallthru
        _
      %p197 = scmp.lt.s32.totalorder %s12, 4
      // Predicated region
      $region21: #{convlstm_cell_forward.1} parent=5 // pred_check
        %p198 = pneg %p197
      $region22: #{convlstm_cell_forward.1} parent=5 // pred_check_branch
        %200 = sbr.rel (%p198) target = $region24
      $region23: #{convlstm_cell_forward.1} parent=5 // pred_region
        // Predicated region
        $region25: #{convlstm_cell_forward.1} parent=23 // pred_check
          %p201 = pneg %p44
        $region26: #{convlstm_cell_forward.1} parent=23 // pred_check_branch
          %203 = sbr.rel (%p201) target = $region28
        $region27: #{convlstm_cell_forward.1} parent=23 // pred_region
          %p204 = scmp.lt.s32.totalorder %s19, 1
          %s205 = scalar_select %p204, %s19, 1
          %s206 = smul.addr %s205, 54
          %s207 = smul.addr %s206, 8
          %s208 = scalar_lea.vmem %s0, %s207
        $region28: #{convlstm_cell_forward.1} parent=23 // pred_fallthru
          _
        // Predicated region
        $region29: #{convlstm_cell_forward.1} parent=23 // pred_check
          %p209 = pneg %p72
        $region30: #{convlstm_cell_forward.1} parent=23 // pred_check_branch
          %211 = sbr.rel (%p209) target = $region32
        $region31: #{convlstm_cell_forward.1} parent=23 // pred_region
          %s212 = sand.u32 %s62, 1
          %s213 = sand.u32 %s62, 1
          %s214 = smul.addr %s213, 32
          %s215 = scalar_lea.vmem [#allocation3], %s214
          %s216 = smul.addr %s19, 8
          %s217 = sadd.s32 %s20, %s216
          %s218 = smul.addr %s217, 8
          %s219 = scalar_lea.vmem %s1, %s218
          // Predicated region
          $region33: #{convlstm_cell_forward.1} parent=31 // pred_check
            _
          $region34: #{convlstm_cell_forward.1} parent=31 // pred_check_branch
            %221 = sbr.rel (0) target = $region36
          $region35: #{convlstm_cell_forward.1} parent=31 // pred_region
            // Predicated region
            $region37: #{convlstm_cell_forward.1} parent=35 // pred_check
              _
            $region38: #{convlstm_cell_forward.1} parent=35 // pred_check_branch
              %223 = sbr.rel (0) target = $region40
            $region39: #{convlstm_cell_forward.1} parent=35 // pred_region
              // Predicated region
              $region52: #{convlstm_cell_forward.1} parent=39 // pred_check
                _
              $region53: #{convlstm_cell_forward.1} parent=39 // pred_check_branch
                %245 = sbr.rel (0) target = $region55
              $region54: #{convlstm_cell_forward.1} parent=39 // pred_region
                loop: start=0, step=1, limit=1
                $region56: #{convlstm_cell_forward.1} parent=54 // loop_pre_header
                  _
                $region57: #{convlstm_cell_forward.1} parent=54 // loop_header
                  %s247 = sphi 0, %s251
                  %p248 = scmp.ge.s32.totalorder %s247, 1
                  %s252 = sphi %s219, %s219
                  %s253 = sphi %s215, %s215
                $region58: #{convlstm_cell_forward.1} parent=54 // loop_header_branch
                  %250 = sbr.rel (%p248) target = $region62
                $region59: #{convlstm_cell_forward.1} parent=54 // loop_body
                  %v254 = vld [vmem:[%s252] sm:$0xff]
                  %255 = vst [vmem:[%s253] sm:$0xff] %v254
                  %v256 = vld [vmem:[%s252 + $0x10] sm:$0xff]
                  %257 = vst [vmem:[%s253 + $0x8] sm:$0xff] %v256
                  %v258 = vld [vmem:[%s252 + $0x20] sm:$0xff]
                  %259 = vst [vmem:[%s253 + $0x10] sm:$0xff] %v258
                  %v260 = vld [vmem:[%s252 + $0x30] sm:$0xff]
                  %261 = vst [vmem:[%s253 + $0x18] sm:$0xff] %v260
                $region60: #{convlstm_cell_forward.1} parent=54 // loop_footer
                  %s251 = sadd.s32 1, %s247
                $region61: #{convlstm_cell_forward.1} parent=54 // loop_footer_branch
                  %246 = sbr.rel target = $region57
                $region62: #{convlstm_cell_forward.1} parent=54 // loop_exit
                  _
              $region55: #{convlstm_cell_forward.1} parent=39 // pred_fallthru
                _
              // Predicated region
              $region63: #{convlstm_cell_forward.1} parent=39 // pred_check
                _
              $region64: #{convlstm_cell_forward.1} parent=39 // pred_check_branch
                %263 = sbr.rel target = $region66
              $region65: #{convlstm_cell_forward.1} parent=39 // pred_region
                _
              $region66: #{convlstm_cell_forward.1} parent=39 // pred_fallthru
                _
            $region40: #{convlstm_cell_forward.1} parent=35 // pred_fallthru
              _
            // Predicated region
            $region41: #{convlstm_cell_forward.1} parent=35 // pred_check
              _
            $region42: #{convlstm_cell_forward.1} parent=35 // pred_check_branch
              %225 = sbr.rel target = $region44
            $region43: #{convlstm_cell_forward.1} parent=35 // pred_region
              %s227 = ssub.s32 256, 1
              loop: start=0, step=1, limit=1
              $region45: #{convlstm_cell_forward.1} parent=43 // loop_pre_header
                _
              $region46: #{convlstm_cell_forward.1} parent=43 // loop_header
                %s229 = sphi 0, %s233
                %p230 = scmp.ge.s32.totalorder %s229, 1
                %s234 = sphi %s219, %s219
                %s235 = sphi %s215, %s215
              $region47: #{convlstm_cell_forward.1} parent=43 // loop_header_branch
                %232 = sbr.rel (%p230) target = $region51
              $region48: #{convlstm_cell_forward.1} parent=43 // loop_body
                %v236 = vld [vmem:[%s234] sm:%s227]
                %237 = vst [vmem:[%s235] sm:%s227] %v236
                %v238 = vld [vmem:[%s234 + $0x10] sm:%s227]
                %239 = vst [vmem:[%s235 + $0x8] sm:%s227] %v238
                %v240 = vld [vmem:[%s234 + $0x20] sm:%s227]
                %241 = vst [vmem:[%s235 + $0x10] sm:%s227] %v240
                %v242 = vld [vmem:[%s234 + $0x30] sm:%s227]
                %243 = vst [vmem:[%s235 + $0x18] sm:%s227] %v242
              $region49: #{convlstm_cell_forward.1} parent=43 // loop_footer
                %s233 = sadd.s32 1, %s229
              $region50: #{convlstm_cell_forward.1} parent=43 // loop_footer_branch
                %228 = sbr.rel target = $region46
              $region51: #{convlstm_cell_forward.1} parent=43 // loop_exit
                _
            $region44: #{convlstm_cell_forward.1} parent=35 // pred_fallthru
              _
          $region36: #{convlstm_cell_forward.1} parent=31 // pred_fallthru
            _
          %264 = vnop
        $region32: #{convlstm_cell_forward.1} parent=23 // pred_fallthru
          _
      $region24: #{convlstm_cell_forward.1} parent=5 // pred_fallthru
        _
      %p265 = scmp.le.s32.totalorder 1, %s12
      %p266 = scmp.lt.s32.totalorder %s12, 5
      %p267 = pnand %p265, %p266
      %p268 = pneg %p267
      // Predicated region
      $region67: #{convlstm_cell_forward.1} parent=5 // pred_check
        _
      $region68: #{convlstm_cell_forward.1} parent=5 // pred_check_branch
        %270 = sbr.rel (%p267) target = $region70
      $region69: #{convlstm_cell_forward.1} parent=5 // pred_region
        %s271 = ssub.s32 %s12, 1
        %s272 = sand.u32 %s65, 1
        %s273 = sand.u32 %s65, 1
        %s274 = smul.addr %s273, 32
        %s275 = scalar_lea.vmem [#allocation3], %s274
        // Predicated region
        $region71: #{convlstm_cell_forward.1} parent=69 // pred_check
          %p276 = pneg %p78
        $region72: #{convlstm_cell_forward.1} parent=69 // pred_check_branch
          %278 = sbr.rel (%p276) target = $region74
        $region73: #{convlstm_cell_forward.1} parent=69 // pred_region
          _
        $region74: #{convlstm_cell_forward.1} parent=69 // pred_fallthru
          _
        %p279 = scmp.lt.s32.totalorder %s21, 1
        %s280 = scalar_select %p279, %s21, 1
        %s281 = smul.addr %s280, 54
        %s282 = smul.addr %s281, 8
        %s283 = scalar_lea.vmem %s0, %s282
        %p284 = pneg %p50
        %p285 = pneg %p47
        %s286 = sand.u32 %s65, 1
        %s287 = sand.u32 %s65, 1
        %s288 = smul.addr %s287, 32
        %s289 = scalar_lea.vmem [#allocation3], %s288
        %p290 = pneg %p78
        %p291 = pneg %p75
        %p292 = pneg %p99
        %p293 = pneg %p96
        %p294 = pneg %p120
        %p295 = pneg %p117
        %p296 = pneg %p148
        %p297 = pneg %p145
        %s298 = sand.u32 %s135, 1
        %s299 = sand.u32 %s135, 1
        %s300 = smul.addr %s299, 32
        %s301 = scalar_lea.vmem [#allocation4], %s300
        %p302 = pneg %p176
        %p303 = pneg %p173
        %s304 = sand.u32 %s163, 1
        %s305 = sand.u32 %s163, 1
        %s306 = smul.addr %s305, 32
        %s307 = scalar_lea.vmem [#allocation5], %s306
        %p308 = scmp.lt.s32.totalorder %s21, 1
        %s309 = scalar_select %p308, %s21, 1
        %s310 = smul.addr %s309, 54
        %s311 = smul.addr %s310, 8
        %s312 = scalar_lea.vmem %s0, %s311
        %s313 = smul.u32 %s22, 8
        %s314 = smul.u32 %s313, 24
        %s315 = scalar_lea.vmem %s312, %s314
        %v316 = vld [vmem:[%s315] sm:$0xff]
        %v317 = vld [vmem:[%s315 + $0x8] sm:$0xff]
        %v318 = vld [vmem:[%s315 + $0x18] sm:$0xff]
        %v319 = vld [vmem:[%s315 + $0x20] sm:$0xff]
        %v320 = vld [vmem:[%s315 + $0x30] sm:$0xff]
        %v321 = vld [vmem:[%s315 + $0x38] sm:$0xff]
        %v322 = vld [vmem:[%s315 + $0x48] sm:$0xff]
        %v323 = vld [vmem:[%s315 + $0x50] sm:$0xff]
        %v324 = vld [vmem:[%s315 + $0x60] sm:$0xff]
        %v325 = vld [vmem:[%s315 + $0x68] sm:$0xff]
        %v326 = vld [vmem:[%s315 + $0x78] sm:$0xff]
        %v327 = vld [vmem:[%s315 + $0x80] sm:$0xff]
        %v328 = vld [vmem:[%s315 + $0x90] sm:$0xff]
        %v329 = vld [vmem:[%s315 + $0x98] sm:$0xff]
        %v330 = vld [vmem:[%s315 + $0xa8] sm:$0xff]
        %v331 = vld [vmem:[%s315 + $0xb0] sm:$0xff]
        %v332 = vpack.c.bf16 %v316, %v316
        %v333 = vpack.c.bf16 %v317, %v317
        %v334 = vpack.c.bf16 %v318, %v318
        %v335 = vpack.c.bf16 %v319, %v319
        %v336 = vpack.c.bf16 %v320, %v320
        %v337 = vpack.c.bf16 %v321, %v321
        %v338 = vpack.c.bf16 %v322, %v322
        %v339 = vpack.c.bf16 %v323, %v323
        %v340 = vpack.c.bf16 %v324, %v324
        %v341 = vpack.c.bf16 %v325, %v325
        %v342 = vpack.c.bf16 %v326, %v326
        %v343 = vpack.c.bf16 %v327, %v327
        %v344 = vpack.c.bf16 %v328, %v328
        %v345 = vpack.c.bf16 %v329, %v329
        %v346 = vpack.c.bf16 %v330, %v330
        %v347 = vpack.c.bf16 %v331, %v331
        %348 = vst [vmem:[#allocation2] sm:$0xf] %v332
        %349 = vst [vmem:[#allocation2 + $0x24] sm:$0xf] %v333
        %350 = vst [vmem:[#allocation2 + $0x48] sm:$0xf] %v334
        %351 = vst [vmem:[#allocation2 + $0x6c] sm:$0xf] %v335
        %352 = vst [vmem:[#allocation2 + $0x90] sm:$0xf] %v336
        %353 = vst [vmem:[#allocation2 + $0xb4] sm:$0xf] %v337
        %354 = vst [vmem:[#allocation2 + $0xd8] sm:$0xf] %v338
        %355 = vst [vmem:[#allocation2 + $0xfc] sm:$0xf] %v339
        %356 = vst [vmem:[#allocation2 + $0x120] sm:$0xf] %v340
        %357 = vst [vmem:[#allocation2 + $0x144] sm:$0xf] %v341
        %358 = vst [vmem:[#allocation2 + $0x168] sm:$0xf] %v342
        %359 = vst [vmem:[#allocation2 + $0x18c] sm:$0xf] %v343
        %360 = vst [vmem:[#allocation2 + $0x1b0] sm:$0xf] %v344
        %361 = vst [vmem:[#allocation2 + $0x1d4] sm:$0xf] %v345
        %362 = vst [vmem:[#allocation2 + $0x1f8] sm:$0xf] %v346
        %363 = vst [vmem:[#allocation2 + $0x21c] sm:$0xf] %v347
        %v364 = vld [vmem:[%s315 + $0x1] sm:$0xff]
        %v365 = vld [vmem:[%s315 + $0x9] sm:$0xff]
        %v366 = vld [vmem:[%s315 + $0x19] sm:$0xff]
        %v367 = vld [vmem:[%s315 + $0x21] sm:$0xff]
        %v368 = vld [vmem:[%s315 + $0x31] sm:$0xff]
        %v369 = vld [vmem:[%s315 + $0x39] sm:$0xff]
        %v370 = vld [vmem:[%s315 + $0x49] sm:$0xff]
        %v371 = vld [vmem:[%s315 + $0x51] sm:$0xff]
        %v372 = vld [vmem:[%s315 + $0x61] sm:$0xff]
        %v373 = vld [vmem:[%s315 + $0x69] sm:$0xff]
        %v374 = vld [vmem:[%s315 + $0x79] sm:$0xff]
        %v375 = vld [vmem:[%s315 + $0x81] sm:$0xff]
        %v376 = vld [vmem:[%s315 + $0x91] sm:$0xff]
        %v377 = vld [vmem:[%s315 + $0x99] sm:$0xff]
        %v378 = vld [vmem:[%s315 + $0xa9] sm:$0xff]
        %v379 = vld [vmem:[%s315 + $0xb1] sm:$0xff]
        %v380 = vpack.c.bf16 %v364, %v364
        %v381 = vpack.c.bf16 %v365, %v365
        %v382 = vpack.c.bf16 %v366, %v366
        %v383 = vpack.c.bf16 %v367, %v367
        %v384 = vpack.c.bf16 %v368, %v368
        %v385 = vpack.c.bf16 %v369, %v369
        %v386 = vpack.c.bf16 %v370, %v370
        %v387 = vpack.c.bf16 %v371, %v371
        %v388 = vpack.c.bf16 %v372, %v372
        %v389 = vpack.c.bf16 %v373, %v373
        %v390 = vpack.c.bf16 %v374, %v374
        %v391 = vpack.c.bf16 %v375, %v375
        %v392 = vpack.c.bf16 %v376, %v376
        %v393 = vpack.c.bf16 %v377, %v377
        %v394 = vpack.c.bf16 %v378, %v378
        %v395 = vpack.c.bf16 %v379, %v379
        %396 = vst [vmem:[#allocation2 + $0x4] sm:$0xf] %v380
        %397 = vst [vmem:[#allocation2 + $0x28] sm:$0xf] %v381
        %398 = vst [vmem:[#allocation2 + $0x4c] sm:$0xf] %v382
        %399 = vst [vmem:[#allocation2 + $0x70] sm:$0xf] %v383
        %400 = vst [vmem:[#allocation2 + $0x94] sm:$0xf] %v384
        %401 = vst [vmem:[#allocation2 + $0xb8] sm:$0xf] %v385
        %402 = vst [vmem:[#allocation2 + $0xdc] sm:$0xf] %v386
        %403 = vst [vmem:[#allocation2 + $0x100] sm:$0xf] %v387
        %404 = vst [vmem:[#allocation2 + $0x124] sm:$0xf] %v388
        %405 = vst [vmem:[#allocation2 + $0x148] sm:$0xf] %v389
        %406 = vst [vmem:[#allocation2 + $0x16c] sm:$0xf] %v390
        %407 = vst [vmem:[#allocation2 + $0x190] sm:$0xf] %v391
        %408 = vst [vmem:[#allocation2 + $0x1b4] sm:$0xf] %v392
        %409 = vst [vmem:[#allocation2 + $0x1d8] sm:$0xf] %v393
        %410 = vst [vmem:[#allocation2 + $0x1fc] sm:$0xf] %v394
        %411 = vst [vmem:[#allocation2 + $0x220] sm:$0xf] %v395
        %v412 = vld [vmem:[%s315 + $0x2] sm:$0xff]
        %v413 = vld [vmem:[%s315 + $0xa] sm:$0xff]
        %v414 = vld [vmem:[%s315 + $0x1a] sm:$0xff]
        %v415 = vld [vmem:[%s315 + $0x22] sm:$0xff]
        %v416 = vld [vmem:[%s315 + $0x32] sm:$0xff]
        %v417 = vld [vmem:[%s315 + $0x3a] sm:$0xff]
        %v418 = vld [vmem:[%s315 + $0x4a] sm:$0xff]
        %v419 = vld [vmem:[%s315 + $0x52] sm:$0xff]
        %v420 = vld [vmem:[%s315 + $0x62] sm:$0xff]
        %v421 = vld [vmem:[%s315 + $0x6a] sm:$0xff]
        %v422 = vld [vmem:[%s315 + $0x7a] sm:$0xff]
        %v423 = vld [vmem:[%s315 + $0x82] sm:$0xff]
        %v424 = vld [vmem:[%s315 + $0x92] sm:$0xff]
        %v425 = vld [vmem:[%s315 + $0x9a] sm:$0xff]
        %v426 = vld [vmem:[%s315 + $0xaa] sm:$0xff]
        %v427 = vld [vmem:[%s315 + $0xb2] sm:$0xff]
        %v428 = vpack.c.bf16 %v412, %v412
        %v429 = vpack.c.bf16 %v413, %v413
        %v430 = vpack.c.bf16 %v414, %v414
        %v431 = vpack.c.bf16 %v415, %v415
        %v432 = vpack.c.bf16 %v416, %v416
        %v433 = vpack.c.bf16 %v417, %v417
        %v434 = vpack.c.bf16 %v418, %v418
        %v435 = vpack.c.bf16 %v419, %v419
        %v436 = vpack.c.bf16 %v420, %v420
        %v437 = vpack.c.bf16 %v421, %v421
        %v438 = vpack.c.bf16 %v422, %v422
        %v439 = vpack.c.bf16 %v423, %v423
        %v440 = vpack.c.bf16 %v424, %v424
        %v441 = vpack.c.bf16 %v425, %v425
        %v442 = vpack.c.bf16 %v426, %v426
        %v443 = vpack.c.bf16 %v427, %v427
        %444 = vst [vmem:[#allocation2 + $0x8] sm:$0xf] %v428
        %445 = vst [vmem:[#allocation2 + $0x2c] sm:$0xf] %v429
        %446 = vst [vmem:[#allocation2 + $0x50] sm:$0xf] %v430
        %447 = vst [vmem:[#allocation2 + $0x74] sm:$0xf] %v431
        %448 = vst [vmem:[#allocation2 + $0x98] sm:$0xf] %v432
        %449 = vst [vmem:[#allocation2 + $0xbc] sm:$0xf] %v433
        %450 = vst [vmem:[#allocation2 + $0xe0] sm:$0xf] %v434
        %451 = vst [vmem:[#allocation2 + $0x104] sm:$0xf] %v435
        %452 = vst [vmem:[#allocation2 + $0x128] sm:$0xf] %v436
        %453 = vst [vmem:[#allocation2 + $0x14c] sm:$0xf] %v437
        %454 = vst [vmem:[#allocation2 + $0x170] sm:$0xf] %v438
        %455 = vst [vmem:[#allocation2 + $0x194] sm:$0xf] %v439
        %456 = vst [vmem:[#allocation2 + $0x1b8] sm:$0xf] %v440
        %457 = vst [vmem:[#allocation2 + $0x1dc] sm:$0xf] %v441
        %458 = vst [vmem:[#allocation2 + $0x200] sm:$0xf] %v442
        %459 = vst [vmem:[#allocation2 + $0x224] sm:$0xf] %v443
        %s460 = sadd.s32 %s313, 1
        %s461 = smul.u32 %s460, 24
        %s462 = scalar_lea.vmem %s312, %s461
        %v463 = vld [vmem:[%s462] sm:$0xff]
        %v464 = vld [vmem:[%s462 + $0x8] sm:$0xff]
        %v465 = vld [vmem:[%s462 + $0x18] sm:$0xff]
        %v466 = vld [vmem:[%s462 + $0x20] sm:$0xff]
        %v467 = vld [vmem:[%s462 + $0x30] sm:$0xff]
        %v468 = vld [vmem:[%s462 + $0x38] sm:$0xff]
        %v469 = vld [vmem:[%s462 + $0x48] sm:$0xff]
        %v470 = vld [vmem:[%s462 + $0x50] sm:$0xff]
        %v471 = vld [vmem:[%s462 + $0x60] sm:$0xff]
        %v472 = vld [vmem:[%s462 + $0x68] sm:$0xff]
        %v473 = vld [vmem:[%s462 + $0x78] sm:$0xff]
        %v474 = vld [vmem:[%s462 + $0x80] sm:$0xff]
        %v475 = vld [vmem:[%s462 + $0x90] sm:$0xff]
        %v476 = vld [vmem:[%s462 + $0x98] sm:$0xff]
        %v477 = vld [vmem:[%s462 + $0xa8] sm:$0xff]
        %v478 = vld [vmem:[%s462 + $0xb0] sm:$0xff]
        %v479 = vpack.c.bf16 %v463, %v463
        %v480 = vpack.c.bf16 %v464, %v464
        %v481 = vpack.c.bf16 %v465, %v465
        %v482 = vpack.c.bf16 %v466, %v466
        %v483 = vpack.c.bf16 %v467, %v467
        %v484 = vpack.c.bf16 %v468, %v468
        %v485 = vpack.c.bf16 %v469, %v469
        %v486 = vpack.c.bf16 %v470, %v470
        %v487 = vpack.c.bf16 %v471, %v471
        %v488 = vpack.c.bf16 %v472, %v472
        %v489 = vpack.c.bf16 %v473, %v473
        %v490 = vpack.c.bf16 %v474, %v474
        %v491 = vpack.c.bf16 %v475, %v475
        %v492 = vpack.c.bf16 %v476, %v476
        %v493 = vpack.c.bf16 %v477, %v477
        %v494 = vpack.c.bf16 %v478, %v478
        %495 = vst [vmem:[#allocation2 + $0xc] sm:$0xf] %v479
        %496 = vst [vmem:[#allocation2 + $0x30] sm:$0xf] %v480
        %497 = vst [vmem:[#allocation2 + $0x54] sm:$0xf] %v481
        %498 = vst [vmem:[#allocation2 + $0x78] sm:$0xf] %v482
        %499 = vst [vmem:[#allocation2 + $0x9c] sm:$0xf] %v483
        %500 = vst [vmem:[#allocation2 + $0xc0] sm:$0xf] %v484
        %501 = vst [vmem:[#allocation2 + $0xe4] sm:$0xf] %v485
        %502 = vst [vmem:[#allocation2 + $0x108] sm:$0xf] %v486
        %503 = vst [vmem:[#allocation2 + $0x12c] sm:$0xf] %v487
        %504 = vst [vmem:[#allocation2 + $0x150] sm:$0xf] %v488
        %505 = vst [vmem:[#allocation2 + $0x174] sm:$0xf] %v489
        %506 = vst [vmem:[#allocation2 + $0x198] sm:$0xf] %v490
        %507 = vst [vmem:[#allocation2 + $0x1bc] sm:$0xf] %v491
        %508 = vst [vmem:[#allocation2 + $0x1e0] sm:$0xf] %v492
        %509 = vst [vmem:[#allocation2 + $0x204] sm:$0xf] %v493
        %510 = vst [vmem:[#allocation2 + $0x228] sm:$0xf] %v494
        %v511 = vld [vmem:[%s462 + $0x1] sm:$0xff]
        %v512 = vld [vmem:[%s462 + $0x9] sm:$0xff]
        %v513 = vld [vmem:[%s462 + $0x19] sm:$0xff]
        %v514 = vld [vmem:[%s462 + $0x21] sm:$0xff]
        %v515 = vld [vmem:[%s462 + $0x31] sm:$0xff]
        %v516 = vld [vmem:[%s462 + $0x39] sm:$0xff]
        %v517 = vld [vmem:[%s462 + $0x49] sm:$0xff]
        %v518 = vld [vmem:[%s462 + $0x51] sm:$0xff]
        %v519 = vld [vmem:[%s462 + $0x61] sm:$0xff]
        %v520 = vld [vmem:[%s462 + $0x69] sm:$0xff]
        %v521 = vld [vmem:[%s462 + $0x79] sm:$0xff]
        %v522 = vld [vmem:[%s462 + $0x81] sm:$0xff]
        %v523 = vld [vmem:[%s462 + $0x91] sm:$0xff]
        %v524 = vld [vmem:[%s462 + $0x99] sm:$0xff]
        %v525 = vld [vmem:[%s462 + $0xa9] sm:$0xff]
        %v526 = vld [vmem:[%s462 + $0xb1] sm:$0xff]
        %v527 = vpack.c.bf16 %v511, %v511
        %v528 = vpack.c.bf16 %v512, %v512
        %v529 = vpack.c.bf16 %v513, %v513
        %v530 = vpack.c.bf16 %v514, %v514
        %v531 = vpack.c.bf16 %v515, %v515
        %v532 = vpack.c.bf16 %v516, %v516
        %v533 = vpack.c.bf16 %v517, %v517
        %v534 = vpack.c.bf16 %v518, %v518
        %v535 = vpack.c.bf16 %v519, %v519
        %v536 = vpack.c.bf16 %v520, %v520
        %v537 = vpack.c.bf16 %v521, %v521
        %v538 = vpack.c.bf16 %v522, %v522
        %v539 = vpack.c.bf16 %v523, %v523
        %v540 = vpack.c.bf16 %v524, %v524
        %v541 = vpack.c.bf16 %v525, %v525
        %v542 = vpack.c.bf16 %v526, %v526
        %543 = vst [vmem:[#allocation2 + $0x10] sm:$0xf] %v527
        %544 = vst [vmem:[#allocation2 + $0x34] sm:$0xf] %v528
        %545 = vst [vmem:[#allocation2 + $0x58] sm:$0xf] %v529
        %546 = vst [vmem:[#allocation2 + $0x7c] sm:$0xf] %v530
        %547 = vst [vmem:[#allocation2 + $0xa0] sm:$0xf] %v531
        %548 = vst [vmem:[#allocation2 + $0xc4] sm:$0xf] %v532
        %549 = vst [vmem:[#allocation2 + $0xe8] sm:$0xf] %v533
        %550 = vst [vmem:[#allocation2 + $0x10c] sm:$0xf] %v534
        %551 = vst [vmem:[#allocation2 + $0x130] sm:$0xf] %v535
        %552 = vst [vmem:[#allocation2 + $0x154] sm:$0xf] %v536
        %553 = vst [vmem:[#allocation2 + $0x178] sm:$0xf] %v537
        %554 = vst [vmem:[#allocation2 + $0x19c] sm:$0xf] %v538
        %555 = vst [vmem:[#allocation2 + $0x1c0] sm:$0xf] %v539
        %556 = vst [vmem:[#allocation2 + $0x1e4] sm:$0xf] %v540
        %557 = vst [vmem:[#allocation2 + $0x208] sm:$0xf] %v541
        %558 = vst [vmem:[#allocation2 + $0x22c] sm:$0xf] %v542
        %v559 = vld [vmem:[%s462 + $0x2] sm:$0xff]
        %v560 = vld [vmem:[%s462 + $0xa] sm:$0xff]
        %v561 = vld [vmem:[%s462 + $0x1a] sm:$0xff]
        %v562 = vld [vmem:[%s462 + $0x22] sm:$0xff]
        %v563 = vld [vmem:[%s462 + $0x32] sm:$0xff]
        %v564 = vld [vmem:[%s462 + $0x3a] sm:$0xff]
        %v565 = vld [vmem:[%s462 + $0x4a] sm:$0xff]
        %v566 = vld [vmem:[%s462 + $0x52] sm:$0xff]
        %v567 = vld [vmem:[%s462 + $0x62] sm:$0xff]
        %v568 = vld [vmem:[%s462 + $0x6a] sm:$0xff]
        %v569 = vld [vmem:[%s462 + $0x7a] sm:$0xff]
        %v570 = vld [vmem:[%s462 + $0x82] sm:$0xff]
        %v571 = vld [vmem:[%s462 + $0x92] sm:$0xff]
        %v572 = vld [vmem:[%s462 + $0x9a] sm:$0xff]
        %v573 = vld [vmem:[%s462 + $0xaa] sm:$0xff]
        %v574 = vld [vmem:[%s462 + $0xb2] sm:$0xff]
        %v575 = vpack.c.bf16 %v559, %v559
        %v576 = vpack.c.bf16 %v560, %v560
        %v577 = vpack.c.bf16 %v561, %v561
        %v578 = vpack.c.bf16 %v562, %v562
        %v579 = vpack.c.bf16 %v563, %v563
        %v580 = vpack.c.bf16 %v564, %v564
        %v581 = vpack.c.bf16 %v565, %v565
        %v582 = vpack.c.bf16 %v566, %v566
        %v583 = vpack.c.bf16 %v567, %v567
        %v584 = vpack.c.bf16 %v568, %v568
        %v585 = vpack.c.bf16 %v569, %v569
        %v586 = vpack.c.bf16 %v570, %v570
        %v587 = vpack.c.bf16 %v571, %v571
        %v588 = vpack.c.bf16 %v572, %v572
        %v589 = vpack.c.bf16 %v573, %v573
        %v590 = vpack.c.bf16 %v574, %v574
        %591 = vst [vmem:[#allocation2 + $0x14] sm:$0xf] %v575
        %592 = vst [vmem:[#allocation2 + $0x38] sm:$0xf] %v576
        %593 = vst [vmem:[#allocation2 + $0x5c] sm:$0xf] %v577
        %594 = vst [vmem:[#allocation2 + $0x80] sm:$0xf] %v578
        %595 = vst [vmem:[#allocation2 + $0xa4] sm:$0xf] %v579
        %596 = vst [vmem:[#allocation2 + $0xc8] sm:$0xf] %v580
        %597 = vst [vmem:[#allocation2 + $0xec] sm:$0xf] %v581
        %598 = vst [vmem:[#allocation2 + $0x110] sm:$0xf] %v582
        %599 = vst [vmem:[#allocation2 + $0x134] sm:$0xf] %v583
        %600 = vst [vmem:[#allocation2 + $0x158] sm:$0xf] %v584
        %601 = vst [vmem:[#allocation2 + $0x17c] sm:$0xf] %v585
        %602 = vst [vmem:[#allocation2 + $0x1a0] sm:$0xf] %v586
        %603 = vst [vmem:[#allocation2 + $0x1c4] sm:$0xf] %v587
        %604 = vst [vmem:[#allocation2 + $0x1e8] sm:$0xf] %v588
        %605 = vst [vmem:[#allocation2 + $0x20c] sm:$0xf] %v589
        %606 = vst [vmem:[#allocation2 + $0x230] sm:$0xf] %v590
        %s607 = sadd.s32 %s313, 2
        %s608 = smul.u32 %s607, 24
        %s609 = scalar_lea.vmem %s312, %s608
        %v610 = vld [vmem:[%s609] sm:$0xff]
        %v611 = vld [vmem:[%s609 + $0x8] sm:$0xff]
        %v612 = vld [vmem:[%s609 + $0x18] sm:$0xff]
        %v613 = vld [vmem:[%s609 + $0x20] sm:$0xff]
        %v614 = vld [vmem:[%s609 + $0x30] sm:$0xff]
        %v615 = vld [vmem:[%s609 + $0x38] sm:$0xff]
        %v616 = vld [vmem:[%s609 + $0x48] sm:$0xff]
        %v617 = vld [vmem:[%s609 + $0x50] sm:$0xff]
        %v618 = vld [vmem:[%s609 + $0x60] sm:$0xff]
        %v619 = vld [vmem:[%s609 + $0x68] sm:$0xff]
        %v620 = vld [vmem:[%s609 + $0x78] sm:$0xff]
        %v621 = vld [vmem:[%s609 + $0x80] sm:$0xff]
        %v622 = vld [vmem:[%s609 + $0x90] sm:$0xff]
        %v623 = vld [vmem:[%s609 + $0x98] sm:$0xff]
        %v624 = vld [vmem:[%s609 + $0xa8] sm:$0xff]
        %v625 = vld [vmem:[%s609 + $0xb0] sm:$0xff]
        %v626 = vpack.c.bf16 %v610, %v610
        %v627 = vpack.c.bf16 %v611, %v611
        %v628 = vpack.c.bf16 %v612, %v612
        %v629 = vpack.c.bf16 %v613, %v613
        %v630 = vpack.c.bf16 %v614, %v614
        %v631 = vpack.c.bf16 %v615, %v615
        %v632 = vpack.c.bf16 %v616, %v616
        %v633 = vpack.c.bf16 %v617, %v617
        %v634 = vpack.c.bf16 %v618, %v618
        %v635 = vpack.c.bf16 %v619, %v619
        %v636 = vpack.c.bf16 %v620, %v620
        %v637 = vpack.c.bf16 %v621, %v621
        %v638 = vpack.c.bf16 %v622, %v622
        %v639 = vpack.c.bf16 %v623, %v623
        %v640 = vpack.c.bf16 %v624, %v624
        %v641 = vpack.c.bf16 %v625, %v625
        %642 = vst [vmem:[#allocation2 + $0x18] sm:$0xf] %v626
        %643 = vst [vmem:[#allocation2 + $0x3c] sm:$0xf] %v627
        %644 = vst [vmem:[#allocation2 + $0x60] sm:$0xf] %v628
        %645 = vst [vmem:[#allocation2 + $0x84] sm:$0xf] %v629
        %646 = vst [vmem:[#allocation2 + $0xa8] sm:$0xf] %v630
        %647 = vst [vmem:[#allocation2 + $0xcc] sm:$0xf] %v631
        %648 = vst [vmem:[#allocation2 + $0xf0] sm:$0xf] %v632
        %649 = vst [vmem:[#allocation2 + $0x114] sm:$0xf] %v633
        %650 = vst [vmem:[#allocation2 + $0x138] sm:$0xf] %v634
        %651 = vst [vmem:[#allocation2 + $0x15c] sm:$0xf] %v635
        %652 = vst [vmem:[#allocation2 + $0x180] sm:$0xf] %v636
        %653 = vst [vmem:[#allocation2 + $0x1a4] sm:$0xf] %v637
        %654 = vst [vmem:[#allocation2 + $0x1c8] sm:$0xf] %v638
        %655 = vst [vmem:[#allocation2 + $0x1ec] sm:$0xf] %v639
        %656 = vst [vmem:[#allocation2 + $0x210] sm:$0xf] %v640
        %657 = vst [vmem:[#allocation2 + $0x234] sm:$0xf] %v641
        %v658 = vld [vmem:[%s609 + $0x1] sm:$0xff]
        %v659 = vld [vmem:[%s609 + $0x9] sm:$0xff]
        %v660 = vld [vmem:[%s609 + $0x19] sm:$0xff]
        %v661 = vld [vmem:[%s609 + $0x21] sm:$0xff]
        %v662 = vld [vmem:[%s609 + $0x31] sm:$0xff]
        %v663 = vld [vmem:[%s609 + $0x39] sm:$0xff]
        %v664 = vld [vmem:[%s609 + $0x49] sm:$0xff]
        %v665 = vld [vmem:[%s609 + $0x51] sm:$0xff]
        %v666 = vld [vmem:[%s609 + $0x61] sm:$0xff]
        %v667 = vld [vmem:[%s609 + $0x69] sm:$0xff]
        %v668 = vld [vmem:[%s609 + $0x79] sm:$0xff]
        %v669 = vld [vmem:[%s609 + $0x81] sm:$0xff]
        %v670 = vld [vmem:[%s609 + $0x91] sm:$0xff]
        %v671 = vld [vmem:[%s609 + $0x99] sm:$0xff]
        %v672 = vld [vmem:[%s609 + $0xa9] sm:$0xff]
        %v673 = vld [vmem:[%s609 + $0xb1] sm:$0xff]
        %v674 = vpack.c.bf16 %v658, %v658
        %v675 = vpack.c.bf16 %v659, %v659
        %v676 = vpack.c.bf16 %v660, %v660
        %v677 = vpack.c.bf16 %v661, %v661
        %v678 = vpack.c.bf16 %v662, %v662
        %v679 = vpack.c.bf16 %v663, %v663
        %v680 = vpack.c.bf16 %v664, %v664
        %v681 = vpack.c.bf16 %v665, %v665
        %v682 = vpack.c.bf16 %v666, %v666
        %v683 = vpack.c.bf16 %v667, %v667
        %v684 = vpack.c.bf16 %v668, %v668
        %v685 = vpack.c.bf16 %v669, %v669
        %v686 = vpack.c.bf16 %v670, %v670
        %v687 = vpack.c.bf16 %v671, %v671
        %v688 = vpack.c.bf16 %v672, %v672
        %v689 = vpack.c.bf16 %v673, %v673
        %690 = vst [vmem:[#allocation2 + $0x1c] sm:$0xf] %v674
        %691 = vst [vmem:[#allocation2 + $0x40] sm:$0xf] %v675
        %692 = vst [vmem:[#allocation2 + $0x64] sm:$0xf] %v676
        %693 = vst [vmem:[#allocation2 + $0x88] sm:$0xf] %v677
        %694 = vst [vmem:[#allocation2 + $0xac] sm:$0xf] %v678
        %695 = vst [vmem:[#allocation2 + $0xd0] sm:$0xf] %v679
        %696 = vst [vmem:[#allocation2 + $0xf4] sm:$0xf] %v680
        %697 = vst [vmem:[#allocation2 + $0x118] sm:$0xf] %v681
        %698 = vst [vmem:[#allocation2 + $0x13c] sm:$0xf] %v682
        %699 = vst [vmem:[#allocation2 + $0x160] sm:$0xf] %v683
        %700 = vst [vmem:[#allocation2 + $0x184] sm:$0xf] %v684
        %701 = vst [vmem:[#allocation2 + $0x1a8] sm:$0xf] %v685
        %702 = vst [vmem:[#allocation2 + $0x1cc] sm:$0xf] %v686
        %703 = vst [vmem:[#allocation2 + $0x1f0] sm:$0xf] %v687
        %704 = vst [vmem:[#allocation2 + $0x214] sm:$0xf] %v688
        %705 = vst [vmem:[#allocation2 + $0x238] sm:$0xf] %v689
        %v706 = vld [vmem:[%s609 + $0x2] sm:$0xff]
        %v707 = vld [vmem:[%s609 + $0xa] sm:$0xff]
        %v708 = vld [vmem:[%s609 + $0x1a] sm:$0xff]
        %v709 = vld [vmem:[%s609 + $0x22] sm:$0xff]
        %v710 = vld [vmem:[%s609 + $0x32] sm:$0xff]
        %v711 = vld [vmem:[%s609 + $0x3a] sm:$0xff]
        %v712 = vld [vmem:[%s609 + $0x4a] sm:$0xff]
        %v713 = vld [vmem:[%s609 + $0x52] sm:$0xff]
        %v714 = vld [vmem:[%s609 + $0x62] sm:$0xff]
        %v715 = vld [vmem:[%s609 + $0x6a] sm:$0xff]
        %v716 = vld [vmem:[%s609 + $0x7a] sm:$0xff]
        %v717 = vld [vmem:[%s609 + $0x82] sm:$0xff]
        %v718 = vld [vmem:[%s609 + $0x92] sm:$0xff]
        %v719 = vld [vmem:[%s609 + $0x9a] sm:$0xff]
        %v720 = vld [vmem:[%s609 + $0xaa] sm:$0xff]
        %v721 = vld [vmem:[%s609 + $0xb2] sm:$0xff]
        %v722 = vpack.c.bf16 %v706, %v706
        %v723 = vpack.c.bf16 %v707, %v707
        %v724 = vpack.c.bf16 %v708, %v708
        %v725 = vpack.c.bf16 %v709, %v709
        %v726 = vpack.c.bf16 %v710, %v710
        %v727 = vpack.c.bf16 %v711, %v711
        %v728 = vpack.c.bf16 %v712, %v712
        %v729 = vpack.c.bf16 %v713, %v713
        %v730 = vpack.c.bf16 %v714, %v714
        %v731 = vpack.c.bf16 %v715, %v715
        %v732 = vpack.c.bf16 %v716, %v716
        %v733 = vpack.c.bf16 %v717, %v717
        %v734 = vpack.c.bf16 %v718, %v718
        %v735 = vpack.c.bf16 %v719, %v719
        %v736 = vpack.c.bf16 %v720, %v720
        %v737 = vpack.c.bf16 %v721, %v721
        %738 = vst [vmem:[#allocation2 + $0x20] sm:$0xf] %v722
        %739 = vst [vmem:[#allocation2 + $0x44] sm:$0xf] %v723
        %740 = vst [vmem:[#allocation2 + $0x68] sm:$0xf] %v724
        %741 = vst [vmem:[#allocation2 + $0x8c] sm:$0xf] %v725
        %742 = vst [vmem:[#allocation2 + $0xb0] sm:$0xf] %v726
        %743 = vst [vmem:[#allocation2 + $0xd4] sm:$0xf] %v727
        %744 = vst [vmem:[#allocation2 + $0xf8] sm:$0xf] %v728
        %745 = vst [vmem:[#allocation2 + $0x11c] sm:$0xf] %v729
        %746 = vst [vmem:[#allocation2 + $0x140] sm:$0xf] %v730
        %747 = vst [vmem:[#allocation2 + $0x164] sm:$0xf] %v731
        %748 = vst [vmem:[#allocation2 + $0x188] sm:$0xf] %v732
        %749 = vst [vmem:[#allocation2 + $0x1ac] sm:$0xf] %v733
        %750 = vst [vmem:[#allocation2 + $0x1d0] sm:$0xf] %v734
        %751 = vst [vmem:[#allocation2 + $0x1f4] sm:$0xf] %v735
        %752 = vst [vmem:[#allocation2 + $0x218] sm:$0xf] %v736
        %753 = vst [vmem:[#allocation2 + $0x23c] sm:$0xf] %v737
        %v754 = vld [vmem:[#allocation2] sm:$0xff]
        %v755 = vld [vmem:[#allocation2 + $0x8] sm:$0xff]
        %v756 = vld [vmem:[#allocation2 + $0x10] sm:$0xff]
        %v757 = vld [vmem:[#allocation2 + $0x18] sm:$0xff]
        %v758 = vld [vmem:[#allocation2 + $0x20] sm:$0xf]
        %v759 = vld [vmem:[#allocation2 + $0x24] sm:$0xff]
        %v760 = vld [vmem:[#allocation2 + $0x2c] sm:$0xff]
        %v761 = vld [vmem:[#allocation2 + $0x34] sm:$0xff]
        %v762 = vld [vmem:[#allocation2 + $0x3c] sm:$0xff]
        %v763 = vld [vmem:[#allocation2 + $0x44] sm:$0xf]
        %v764 = vld [vmem:[#allocation2 + $0x48] sm:$0xff]
        %v765 = vld [vmem:[#allocation2 + $0x50] sm:$0xff]
        %v766 = vld [vmem:[#allocation2 + $0x58] sm:$0xff]
        %v767 = vld [vmem:[#allocation2 + $0x60] sm:$0xff]
        %v768 = vld [vmem:[#allocation2 + $0x68] sm:$0xf]
        %v769 = vld [vmem:[#allocation2 + $0x6c] sm:$0xff]
        %v770 = vld [vmem:[#allocation2 + $0x74] sm:$0xff]
        %v771 = vld [vmem:[#allocation2 + $0x7c] sm:$0xff]
        %v772 = vld [vmem:[#allocation2 + $0x84] sm:$0xff]
        %v773 = vld [vmem:[#allocation2 + $0x8c] sm:$0xf]
        %v774 = vld [vmem:[#allocation2 + $0x90] sm:$0xff]
        %v775 = vld [vmem:[#allocation2 + $0x98] sm:$0xff]
        %v776 = vld [vmem:[#allocation2 + $0xa0] sm:$0xff]
        %v777 = vld [vmem:[#allocation2 + $0xa8] sm:$0xff]
        %v778 = vld [vmem:[#allocation2 + $0xb0] sm:$0xf]
        %v779 = vld [vmem:[#allocation2 + $0xb4] sm:$0xff]
        %v780 = vld [vmem:[#allocation2 + $0xbc] sm:$0xff]
        %v781 = vld [vmem:[#allocation2 + $0xc4] sm:$0xff]
        %v782 = vld [vmem:[#allocation2 + $0xcc] sm:$0xff]
        %v783 = vld [vmem:[#allocation2 + $0xd4] sm:$0xf]
        %v784 = vld [vmem:[#allocation2 + $0xd8] sm:$0xff]
        %v785 = vld [vmem:[#allocation2 + $0xe0] sm:$0xff]
        %v786 = vld [vmem:[#allocation2 + $0xe8] sm:$0xff]
        %v787 = vld [vmem:[#allocation2 + $0xf0] sm:$0xff]
        %v788 = vld [vmem:[#allocation2 + $0xf8] sm:$0xf]
        %v789 = vld [vmem:[#allocation2 + $0xfc] sm:$0xff]
        %v790 = vld [vmem:[#allocation2 + $0x104] sm:$0xff]
        %v791 = vld [vmem:[#allocation2 + $0x10c] sm:$0xff]
        %v792 = vld [vmem:[#allocation2 + $0x114] sm:$0xff]
        %v793 = vld [vmem:[#allocation2 + $0x11c] sm:$0xf]
        %v794 = vld [vmem:[#allocation2 + $0x120] sm:$0xff]
        %v795 = vld [vmem:[#allocation2 + $0x128] sm:$0xff]
        %v796 = vld [vmem:[#allocation2 + $0x130] sm:$0xff]
        %v797 = vld [vmem:[#allocation2 + $0x138] sm:$0xff]
        %v798 = vld [vmem:[#allocation2 + $0x140] sm:$0xf]
        %v799 = vld [vmem:[#allocation2 + $0x144] sm:$0xff]
        %v800 = vld [vmem:[#allocation2 + $0x14c] sm:$0xff]
        %v801 = vld [vmem:[#allocation2 + $0x154] sm:$0xff]
        %v802 = vld [vmem:[#allocation2 + $0x15c] sm:$0xff]
        %v803 = vld [vmem:[#allocation2 + $0x164] sm:$0xf]
        %v804 = vld [vmem:[#allocation2 + $0x168] sm:$0xff]
        %v805 = vld [vmem:[#allocation2 + $0x170] sm:$0xff]
        %v806 = vld [vmem:[#allocation2 + $0x178] sm:$0xff]
        %v807 = vld [vmem:[#allocation2 + $0x180] sm:$0xff]
        %v808 = vld [vmem:[#allocation2 + $0x188] sm:$0xf]
        %v809 = vld [vmem:[#allocation2 + $0x18c] sm:$0xff]
        %v810 = vld [vmem:[#allocation2 + $0x194] sm:$0xff]
        %v811 = vld [vmem:[#allocation2 + $0x19c] sm:$0xff]
        %v812 = vld [vmem:[#allocation2 + $0x1a4] sm:$0xff]
        %v813 = vld [vmem:[#allocation2 + $0x1ac] sm:$0xf]
        %v814 = vld [vmem:[#allocation2 + $0x1b0] sm:$0xff]
        %v815 = vld [vmem:[#allocation2 + $0x1b8] sm:$0xff]
        %v816 = vld [vmem:[#allocation2 + $0x1c0] sm:$0xff]
        %v817 = vld [vmem:[#allocation2 + $0x1c8] sm:$0xff]
        %v818 = vld [vmem:[#allocation2 + $0x1d0] sm:$0xf]
        %v819 = vld [vmem:[#allocation2 + $0x1d4] sm:$0xff]
        %v820 = vld [vmem:[#allocation2 + $0x1dc] sm:$0xff]
        %v821 = vld [vmem:[#allocation2 + $0x1e4] sm:$0xff]
        %v822 = vld [vmem:[#allocation2 + $0x1ec] sm:$0xff]
        %v823 = vld [vmem:[#allocation2 + $0x1f4] sm:$0xf]
        %v824 = vld [vmem:[#allocation2 + $0x1f8] sm:$0xff]
        %v825 = vld [vmem:[#allocation2 + $0x200] sm:$0xff]
        %v826 = vld [vmem:[#allocation2 + $0x208] sm:$0xff]
        %v827 = vld [vmem:[#allocation2 + $0x210] sm:$0xff]
        %v828 = vld [vmem:[#allocation2 + $0x218] sm:$0xf]
        %v829 = vld [vmem:[#allocation2 + $0x21c] sm:$0xff]
        %v830 = vld [vmem:[#allocation2 + $0x224] sm:$0xff]
        %v831 = vld [vmem:[#allocation2 + $0x22c] sm:$0xff]
        %v832 = vld [vmem:[#allocation2 + $0x234] sm:$0xff]
        %v833 = vld [vmem:[#allocation2 + $0x23c] sm:$0xf]
        %v834 = vld [vmem:[%s2] sm:$0xf]
        %v835 = vld [vmem:[%s2 + $0x4] sm:$0xf]
        %v836 = vld [vmem:[%s2 + $0x8] sm:$0xf]
        %v837 = vld [vmem:[%s2 + $0xc] sm:$0xf]
        %v838 = vld [vmem:[%s2 + $0x10] sm:$0xf]
        %v839 = vld [vmem:[%s2 + $0x14] sm:$0xf]
        %v840 = vld [vmem:[%s2 + $0x18] sm:$0xf]
        %v841 = vld [vmem:[%s2 + $0x1c] sm:$0xf]
        %v842 = vld [vmem:[%s2 + $0x20] sm:$0xf]
        %v843 = vld [vmem:[%s2 + $0x24] sm:$0xf]
        %v844 = vld [vmem:[%s2 + $0x28] sm:$0xf]
        %v845 = vld [vmem:[%s2 + $0x2c] sm:$0xf]
        %v846 = vld [vmem:[%s2 + $0x30] sm:$0xf]
        %v847 = vld [vmem:[%s2 + $0x34] sm:$0xf]
        %v848 = vld [vmem:[%s2 + $0x38] sm:$0xf]
        %v849 = vld [vmem:[%s2 + $0x3c] sm:$0xf]
        %v850 = vld [vmem:[%s2 + $0x40] sm:$0xf]
        %v851 = vld [vmem:[%s2 + $0x44] sm:$0xf]
        %v852 = vld [vmem:[%s2 + $0x48] sm:$0xf]
        %v853 = vld [vmem:[%s2 + $0x4c] sm:$0xf]
        %v854 = vld [vmem:[%s2 + $0x50] sm:$0xf]
        %v855 = vld [vmem:[%s2 + $0x54] sm:$0xf]
        %v856 = vld [vmem:[%s2 + $0x58] sm:$0xf]
        %v857 = vld [vmem:[%s2 + $0x5c] sm:$0xf]
        %v858 = vld [vmem:[%s2 + $0x60] sm:$0xf]
        %v859 = vld [vmem:[%s2 + $0x64] sm:$0xf]
        %v860 = vld [vmem:[%s2 + $0x68] sm:$0xf]
        %v861 = vld [vmem:[%s2 + $0x6c] sm:$0xf]
        %v862 = vld [vmem:[%s2 + $0x70] sm:$0xf]
        %v863 = vld [vmem:[%s2 + $0x74] sm:$0xf]
        %v864 = vld [vmem:[%s2 + $0x78] sm:$0xf]
        %v865 = vld [vmem:[%s2 + $0x7c] sm:$0xf]
        %v866 = vld [vmem:[%s2 + $0x80] sm:$0xf]
        %v867 = vld [vmem:[%s2 + $0x84] sm:$0xf]
        %v868 = vld [vmem:[%s2 + $0x88] sm:$0xf]
        %v869 = vld [vmem:[%s2 + $0x8c] sm:$0xf]
        %v870 = vld [vmem:[%s2 + $0x90] sm:$0xf]
        %v871 = vld [vmem:[%s2 + $0x94] sm:$0xf]
        %v872 = vld [vmem:[%s2 + $0x98] sm:$0xf]
        %v873 = vld [vmem:[%s2 + $0x9c] sm:$0xf]
        %v874 = vld [vmem:[%s2 + $0xa0] sm:$0xf]
        %v875 = vld [vmem:[%s2 + $0xa4] sm:$0xf]
        %v876 = vld [vmem:[%s2 + $0xa8] sm:$0xf]
        %v877 = vld [vmem:[%s2 + $0xac] sm:$0xf]
        %v878 = vld [vmem:[%s2 + $0xb0] sm:$0xf]
        %v879 = vld [vmem:[%s2 + $0xb4] sm:$0xf]
        %v880 = vld [vmem:[%s2 + $0xb8] sm:$0xf]
        %v881 = vld [vmem:[%s2 + $0xbc] sm:$0xf]
        %v882 = vld [vmem:[%s2 + $0xc0] sm:$0xf]
        %v883 = vld [vmem:[%s2 + $0xc4] sm:$0xf]
        %v884 = vld [vmem:[%s2 + $0xc8] sm:$0xf]
        %v885 = vld [vmem:[%s2 + $0xcc] sm:$0xf]
        %v886 = vld [vmem:[%s2 + $0xd0] sm:$0xf]
        %v887 = vld [vmem:[%s2 + $0xd4] sm:$0xf]
        %v888 = vld [vmem:[%s2 + $0xd8] sm:$0xf]
        %v889 = vld [vmem:[%s2 + $0xdc] sm:$0xf]
        %v890 = vld [vmem:[%s2 + $0xe0] sm:$0xf]
        %v891 = vld [vmem:[%s2 + $0xe4] sm:$0xf]
        %v892 = vld [vmem:[%s2 + $0xe8] sm:$0xf]
        %v893 = vld [vmem:[%s2 + $0xec] sm:$0xf]
        %v894 = vld [vmem:[%s2 + $0xf0] sm:$0xf]
        %v895 = vld [vmem:[%s2 + $0xf4] sm:$0xf]
        %v896 = vld [vmem:[%s2 + $0xf8] sm:$0xf]
        %v897 = vld [vmem:[%s2 + $0xfc] sm:$0xf]
        %v898 = vld [vmem:[%s2 + $0x100] sm:$0xf]
        %v899 = vld [vmem:[%s2 + $0x104] sm:$0xf]
        %v900 = vld [vmem:[%s2 + $0x108] sm:$0xf]
        %v901 = vld [vmem:[%s2 + $0x10c] sm:$0xf]
        %v902 = vld [vmem:[%s2 + $0x110] sm:$0xf]
        %v903 = vld [vmem:[%s2 + $0x114] sm:$0xf]
        %v904 = vld [vmem:[%s2 + $0x118] sm:$0xf]
        %v905 = vld [vmem:[%s2 + $0x11c] sm:$0xf]
        %v906 = vld [vmem:[%s2 + $0x120] sm:$0xf]
        %v907 = vld [vmem:[%s2 + $0x124] sm:$0xf]
        %v908 = vld [vmem:[%s2 + $0x128] sm:$0xf]
        %v909 = vld [vmem:[%s2 + $0x12c] sm:$0xf]
        %v910 = vld [vmem:[%s2 + $0x130] sm:$0xf]
        %v911 = vld [vmem:[%s2 + $0x134] sm:$0xf]
        %v912 = vld [vmem:[%s2 + $0x138] sm:$0xf]
        %v913 = vld [vmem:[%s2 + $0x13c] sm:$0xf]
        %v914 = vld [vmem:[%s2 + $0x140] sm:$0xf]
        %v915 = vld [vmem:[%s2 + $0x144] sm:$0xf]
        %v916 = vld [vmem:[%s2 + $0x148] sm:$0xf]
        %v917 = vld [vmem:[%s2 + $0x14c] sm:$0xf]
        %v918 = vld [vmem:[%s2 + $0x150] sm:$0xf]
        %v919 = vld [vmem:[%s2 + $0x154] sm:$0xf]
        %v920 = vld [vmem:[%s2 + $0x158] sm:$0xf]
        %v921 = vld [vmem:[%s2 + $0x15c] sm:$0xf]
        %v922 = vld [vmem:[%s2 + $0x160] sm:$0xf]
        %v923 = vld [vmem:[%s2 + $0x164] sm:$0xf]
        %v924 = vld [vmem:[%s2 + $0x168] sm:$0xf]
        %v925 = vld [vmem:[%s2 + $0x16c] sm:$0xf]
        %v926 = vld [vmem:[%s2 + $0x170] sm:$0xf]
        %v927 = vld [vmem:[%s2 + $0x174] sm:$0xf]
        %v928 = vld [vmem:[%s2 + $0x178] sm:$0xf]
        %v929 = vld [vmem:[%s2 + $0x17c] sm:$0xf]
        %v930 = vld [vmem:[%s2 + $0x180] sm:$0xf]
        %v931 = vld [vmem:[%s2 + $0x184] sm:$0xf]
        %v932 = vld [vmem:[%s2 + $0x188] sm:$0xf]
        %v933 = vld [vmem:[%s2 + $0x18c] sm:$0xf]
        %v934 = vld [vmem:[%s2 + $0x190] sm:$0xf]
        %v935 = vld [vmem:[%s2 + $0x194] sm:$0xf]
        %v936 = vld [vmem:[%s2 + $0x198] sm:$0xf]
        %v937 = vld [vmem:[%s2 + $0x19c] sm:$0xf]
        %v938 = vld [vmem:[%s2 + $0x1a0] sm:$0xf]
        %v939 = vld [vmem:[%s2 + $0x1a4] sm:$0xf]
        %v940 = vld [vmem:[%s2 + $0x1a8] sm:$0xf]
        %v941 = vld [vmem:[%s2 + $0x1ac] sm:$0xf]
        %v942 = vld [vmem:[%s2 + $0x1b0] sm:$0xf]
        %v943 = vld [vmem:[%s2 + $0x1b4] sm:$0xf]
        %v944 = vld [vmem:[%s2 + $0x1b8] sm:$0xf]
        %v945 = vld [vmem:[%s2 + $0x1bc] sm:$0xf]
        %v946 = vld [vmem:[%s2 + $0x1c0] sm:$0xf]
        %v947 = vld [vmem:[%s2 + $0x1c4] sm:$0xf]
        %v948 = vld [vmem:[%s2 + $0x1c8] sm:$0xf]
        %v949 = vld [vmem:[%s2 + $0x1cc] sm:$0xf]
        %v950 = vld [vmem:[%s2 + $0x1d0] sm:$0xf]
        %v951 = vld [vmem:[%s2 + $0x1d4] sm:$0xf]
        %v952 = vld [vmem:[%s2 + $0x1d8] sm:$0xf]
        %v953 = vld [vmem:[%s2 + $0x1dc] sm:$0xf]
        %v954 = vld [vmem:[%s2 + $0x1e0] sm:$0xf]
        %v955 = vld [vmem:[%s2 + $0x1e4] sm:$0xf]
        %v956 = vld [vmem:[%s2 + $0x1e8] sm:$0xf]
        %v957 = vld [vmem:[%s2 + $0x1ec] sm:$0xf]
        %v958 = vld [vmem:[%s2 + $0x1f0] sm:$0xf]
        %v959 = vld [vmem:[%s2 + $0x1f4] sm:$0xf]
        %v960 = vld [vmem:[%s2 + $0x1f8] sm:$0xf]
        %v961 = vld [vmem:[%s2 + $0x1fc] sm:$0xf]
        %v962 = vld [vmem:[%s2 + $0x200] sm:$0xf]
        %v963 = vld [vmem:[%s2 + $0x204] sm:$0xf]
        %v964 = vld [vmem:[%s2 + $0x208] sm:$0xf]
        %v965 = vld [vmem:[%s2 + $0x20c] sm:$0xf]
        %v966 = vld [vmem:[%s2 + $0x210] sm:$0xf]
        %v967 = vld [vmem:[%s2 + $0x214] sm:$0xf]
        %v968 = vld [vmem:[%s2 + $0x218] sm:$0xf]
        %v969 = vld [vmem:[%s2 + $0x21c] sm:$0xf]
        %v970 = vld [vmem:[%s2 + $0x220] sm:$0xf]
        %v971 = vld [vmem:[%s2 + $0x224] sm:$0xf]
        %v972 = vld [vmem:[%s2 + $0x228] sm:$0xf]
        %v973 = vld [vmem:[%s2 + $0x22c] sm:$0xf]
        %v974 = vld [vmem:[%s2 + $0x230] sm:$0xf]
        %v975 = vld [vmem:[%s2 + $0x234] sm:$0xf]
        %v976 = vld [vmem:[%s2 + $0x238] sm:$0xf]
        %v977 = vld [vmem:[%s2 + $0x23c] sm:$0xf]
        %v978 = vld [vmem:[%s3] sm:$0x1]
        %v980 = vperm.slane %v978, 0
        %v1062 = vunpack.c.l.b16 %v754
        %v1063 = vunpack.c.h.b16 %v754
        %v1064 = vunpack.c.l.b16 %v755
        %v1065 = vunpack.c.h.b16 %v755
        %v1066 = vunpack.c.l.b16 %v756
        %v1067 = vunpack.c.h.b16 %v756
        %v1068 = vunpack.c.l.b16 %v757
        %v1069 = vunpack.c.h.b16 %v757
        %v1070 = vunpack.c.l.b16 %v758
        %v1071 = vunpack.c.l.b16 %v759
        %v1072 = vunpack.c.h.b16 %v759
        %v1073 = vunpack.c.l.b16 %v760
        %v1074 = vunpack.c.h.b16 %v760
        %v1075 = vunpack.c.l.b16 %v761
        %v1076 = vunpack.c.h.b16 %v761
        %v1077 = vunpack.c.l.b16 %v762
        %v1078 = vunpack.c.h.b16 %v762
        %v1079 = vunpack.c.l.b16 %v763
        %v1080 = vunpack.c.l.b16 %v764
        %v1081 = vunpack.c.h.b16 %v764
        %v1082 = vunpack.c.l.b16 %v765
        %v1083 = vunpack.c.h.b16 %v765
        %v1084 = vunpack.c.l.b16 %v766
        %v1085 = vunpack.c.h.b16 %v766
        %v1086 = vunpack.c.l.b16 %v767
        %v1087 = vunpack.c.h.b16 %v767
        %v1088 = vunpack.c.l.b16 %v768
        %v1089 = vunpack.c.l.b16 %v769
        %v1090 = vunpack.c.h.b16 %v769
        %v1091 = vunpack.c.l.b16 %v770
        %v1092 = vunpack.c.h.b16 %v770
        %v1093 = vunpack.c.l.b16 %v771
        %v1094 = vunpack.c.h.b16 %v771
        %v1095 = vunpack.c.l.b16 %v772
        %v1096 = vunpack.c.h.b16 %v772
        %v1097 = vunpack.c.l.b16 %v773
        %v1098 = vunpack.c.l.b16 %v774
        %v1099 = vunpack.c.h.b16 %v774
        %v1100 = vunpack.c.l.b16 %v775
        %v1101 = vunpack.c.h.b16 %v775
        %v1102 = vunpack.c.l.b16 %v776
        %v1103 = vunpack.c.h.b16 %v776
        %v1104 = vunpack.c.l.b16 %v777
        %v1105 = vunpack.c.h.b16 %v777
        %v1106 = vunpack.c.l.b16 %v778
        %v1107 = vunpack.c.l.b16 %v779
        %v1108 = vunpack.c.h.b16 %v779
        %v1109 = vunpack.c.l.b16 %v780
        %v1110 = vunpack.c.h.b16 %v780
        %v1111 = vunpack.c.l.b16 %v781
        %v1112 = vunpack.c.h.b16 %v781
        %v1113 = vunpack.c.l.b16 %v782
        %v1114 = vunpack.c.h.b16 %v782
        %v1115 = vunpack.c.l.b16 %v783
        %v1116 = vunpack.c.l.b16 %v784
        %v1117 = vunpack.c.h.b16 %v784
        %v1118 = vunpack.c.l.b16 %v785
        %v1119 = vunpack.c.h.b16 %v785
        %v1120 = vunpack.c.l.b16 %v786
        %v1121 = vunpack.c.h.b16 %v786
        %v1122 = vunpack.c.l.b16 %v787
        %v1123 = vunpack.c.h.b16 %v787
        %v1124 = vunpack.c.l.b16 %v788
        %v1125 = vunpack.c.l.b16 %v789
        %v1126 = vunpack.c.h.b16 %v789
        %v1127 = vunpack.c.l.b16 %v790
        %v1128 = vunpack.c.h.b16 %v790
        %v1129 = vunpack.c.l.b16 %v791
        %v1130 = vunpack.c.h.b16 %v791
        %v1131 = vunpack.c.l.b16 %v792
        %v1132 = vunpack.c.h.b16 %v792
        %v1133 = vunpack.c.l.b16 %v793
        %v1134 = vunpack.c.l.b16 %v794
        %v1135 = vunpack.c.h.b16 %v794
        %v1136 = vunpack.c.l.b16 %v795
        %v1137 = vunpack.c.h.b16 %v795
        %v1138 = vunpack.c.l.b16 %v796
        %v1139 = vunpack.c.h.b16 %v796
        %v1140 = vunpack.c.l.b16 %v797
        %v1141 = vunpack.c.h.b16 %v797
        %v1142 = vunpack.c.l.b16 %v798
        %v1143 = vunpack.c.l.b16 %v799
        %v1144 = vunpack.c.h.b16 %v799
        %v1145 = vunpack.c.l.b16 %v800
        %v1146 = vunpack.c.h.b16 %v800
        %v1147 = vunpack.c.l.b16 %v801
        %v1148 = vunpack.c.h.b16 %v801
        %v1149 = vunpack.c.l.b16 %v802
        %v1150 = vunpack.c.h.b16 %v802
        %v1151 = vunpack.c.l.b16 %v803
        %v1152 = vunpack.c.l.b16 %v804
        %v1153 = vunpack.c.h.b16 %v804
        %v1154 = vunpack.c.l.b16 %v805
        %v1155 = vunpack.c.h.b16 %v805
        %v1156 = vunpack.c.l.b16 %v806
        %v1157 = vunpack.c.h.b16 %v806
        %v1158 = vunpack.c.l.b16 %v807
        %v1159 = vunpack.c.h.b16 %v807
        %v1160 = vunpack.c.l.b16 %v808
        %v1161 = vunpack.c.l.b16 %v809
        %v1162 = vunpack.c.h.b16 %v809
        %v1163 = vunpack.c.l.b16 %v810
        %v1164 = vunpack.c.h.b16 %v810
        %v1165 = vunpack.c.l.b16 %v811
        %v1166 = vunpack.c.h.b16 %v811
        %v1167 = vunpack.c.l.b16 %v812
        %v1168 = vunpack.c.h.b16 %v812
        %v1169 = vunpack.c.l.b16 %v813
        %v1170 = vunpack.c.l.b16 %v814
        %v1171 = vunpack.c.h.b16 %v814
        %v1172 = vunpack.c.l.b16 %v815
        %v1173 = vunpack.c.h.b16 %v815
        %v1174 = vunpack.c.l.b16 %v816
        %v1175 = vunpack.c.h.b16 %v816
        %v1176 = vunpack.c.l.b16 %v817
        %v1177 = vunpack.c.h.b16 %v817
        %v1178 = vunpack.c.l.b16 %v818
        %v1179 = vunpack.c.l.b16 %v819
        %v1180 = vunpack.c.h.b16 %v819
        %v1181 = vunpack.c.l.b16 %v820
        %v1182 = vunpack.c.h.b16 %v820
        %v1183 = vunpack.c.l.b16 %v821
        %v1184 = vunpack.c.h.b16 %v821
        %v1185 = vunpack.c.l.b16 %v822
        %v1186 = vunpack.c.h.b16 %v822
        %v1187 = vunpack.c.l.b16 %v823
        %v1188 = vunpack.c.l.b16 %v824
        %v1189 = vunpack.c.h.b16 %v824
        %v1190 = vunpack.c.l.b16 %v825
        %v1191 = vunpack.c.h.b16 %v825
        %v1192 = vunpack.c.l.b16 %v826
        %v1193 = vunpack.c.h.b16 %v826
        %v1194 = vunpack.c.l.b16 %v827
        %v1195 = vunpack.c.h.b16 %v827
        %v1196 = vunpack.c.l.b16 %v828
        %v1197 = vunpack.c.l.b16 %v829
        %v1198 = vunpack.c.h.b16 %v829
        %v1199 = vunpack.c.l.b16 %v830
        %v1200 = vunpack.c.h.b16 %v830
        %v1201 = vunpack.c.l.b16 %v831
        %v1202 = vunpack.c.h.b16 %v831
        %v1203 = vunpack.c.l.b16 %v832
        %v1204 = vunpack.c.h.b16 %v832
        %v1205 = vunpack.c.l.b16 %v833
        %v1206 = vpack.c.b16 %v1071, %v1062
        %v1207 = vpack.c.b16 %v1072, %v1063
        %v1208 = vpack.c.b16 %v1073, %v1064
        %v1209 = vpack.c.b16 %v1074, %v1065
        %v1210 = vpack.c.b16 %v1075, %v1066
        %v1211 = vpack.c.b16 %v1076, %v1067
        %v1212 = vpack.c.b16 %v1077, %v1068
        %v1213 = vpack.c.b16 %v1078, %v1069
        %v1214 = vpack.c.b16 %v1079, %v1070
        %v1215 = vpack.c.b16 %v1089, %v1080
        %v1216 = vpack.c.b16 %v1090, %v1081
        %v1217 = vpack.c.b16 %v1091, %v1082
        %v1218 = vpack.c.b16 %v1092, %v1083
        %v1219 = vpack.c.b16 %v1093, %v1084
        %v1220 = vpack.c.b16 %v1094, %v1085
        %v1221 = vpack.c.b16 %v1095, %v1086
        %v1222 = vpack.c.b16 %v1096, %v1087
        %v1223 = vpack.c.b16 %v1097, %v1088
        %v1224 = vpack.c.b16 %v1107, %v1098
        %v1225 = vpack.c.b16 %v1108, %v1099
        %v1226 = vpack.c.b16 %v1109, %v1100
        %v1227 = vpack.c.b16 %v1110, %v1101
        %v1228 = vpack.c.b16 %v1111, %v1102
        %v1229 = vpack.c.b16 %v1112, %v1103
        %v1230 = vpack.c.b16 %v1113, %v1104
        %v1231 = vpack.c.b16 %v1114, %v1105
        %v1232 = vpack.c.b16 %v1115, %v1106
        %v1233 = vpack.c.b16 %v1125, %v1116
        %v1234 = vpack.c.b16 %v1126, %v1117
        %v1235 = vpack.c.b16 %v1127, %v1118
        %v1236 = vpack.c.b16 %v1128, %v1119
        %v1237 = vpack.c.b16 %v1129, %v1120
        %v1238 = vpack.c.b16 %v1130, %v1121
        %v1239 = vpack.c.b16 %v1131, %v1122
        %v1240 = vpack.c.b16 %v1132, %v1123
        %v1241 = vpack.c.b16 %v1133, %v1124
        %v1242 = vpack.c.b16 %v1143, %v1134
        %v1243 = vpack.c.b16 %v1144, %v1135
        %v1244 = vpack.c.b16 %v1145, %v1136
        %v1245 = vpack.c.b16 %v1146, %v1137
        %v1246 = vpack.c.b16 %v1147, %v1138
        %v1247 = vpack.c.b16 %v1148, %v1139
        %v1248 = vpack.c.b16 %v1149, %v1140
        %v1249 = vpack.c.b16 %v1150, %v1141
        %v1250 = vpack.c.b16 %v1151, %v1142
        %v1251 = vpack.c.b16 %v1161, %v1152
        %v1252 = vpack.c.b16 %v1162, %v1153
        %v1253 = vpack.c.b16 %v1163, %v1154
        %v1254 = vpack.c.b16 %v1164, %v1155
        %v1255 = vpack.c.b16 %v1165, %v1156
        %v1256 = vpack.c.b16 %v1166, %v1157
        %v1257 = vpack.c.b16 %v1167, %v1158
        %v1258 = vpack.c.b16 %v1168, %v1159
        %v1259 = vpack.c.b16 %v1169, %v1160
        %v1260 = vpack.c.b16 %v1179, %v1170
        %v1261 = vpack.c.b16 %v1180, %v1171
        %v1262 = vpack.c.b16 %v1181, %v1172
        %v1263 = vpack.c.b16 %v1182, %v1173
        %v1264 = vpack.c.b16 %v1183, %v1174
        %v1265 = vpack.c.b16 %v1184, %v1175
        %v1266 = vpack.c.b16 %v1185, %v1176
        %v1267 = vpack.c.b16 %v1186, %v1177
        %v1268 = vpack.c.b16 %v1187, %v1178
        %v1269 = vpack.c.b16 %v1197, %v1188
        %v1270 = vpack.c.b16 %v1198, %v1189
        %v1271 = vpack.c.b16 %v1199, %v1190
        %v1272 = vpack.c.b16 %v1200, %v1191
        %v1273 = vpack.c.b16 %v1201, %v1192
        %v1274 = vpack.c.b16 %v1202, %v1193
        %v1275 = vpack.c.b16 %v1203, %v1194
        %v1276 = vpack.c.b16 %v1204, %v1195
        %v1277 = vpack.c.b16 %v1205, %v1196
        %v1494 = vunpack.c.l.b16 %v834
        %v1495 = vunpack.c.l.b16 %v835
        %v1496 = vunpack.c.l.b16 %v836
        %v1497 = vunpack.c.l.b16 %v837
        %v1498 = vunpack.c.l.b16 %v838
        %v1499 = vunpack.c.l.b16 %v839
        %v1500 = vunpack.c.l.b16 %v840
        %v1501 = vunpack.c.l.b16 %v841
        %v1502 = vunpack.c.l.b16 %v842
        %v1503 = vunpack.c.l.b16 %v843
        %v1504 = vunpack.c.l.b16 %v844
        %v1505 = vunpack.c.l.b16 %v845
        %v1506 = vunpack.c.l.b16 %v846
        %v1507 = vunpack.c.l.b16 %v847
        %v1508 = vunpack.c.l.b16 %v848
        %v1509 = vunpack.c.l.b16 %v849
        %v1510 = vunpack.c.l.b16 %v850
        %v1511 = vunpack.c.l.b16 %v851
        %v1512 = vunpack.c.l.b16 %v852
        %v1513 = vunpack.c.l.b16 %v853
        %v1514 = vunpack.c.l.b16 %v854
        %v1515 = vunpack.c.l.b16 %v855
        %v1516 = vunpack.c.l.b16 %v856
        %v1517 = vunpack.c.l.b16 %v857
        %v1518 = vunpack.c.l.b16 %v858
        %v1519 = vunpack.c.l.b16 %v859
        %v1520 = vunpack.c.l.b16 %v860
        %v1521 = vunpack.c.l.b16 %v861
        %v1522 = vunpack.c.l.b16 %v862
        %v1523 = vunpack.c.l.b16 %v863
        %v1524 = vunpack.c.l.b16 %v864
        %v1525 = vunpack.c.l.b16 %v865
        %v1526 = vunpack.c.l.b16 %v866
        %v1527 = vunpack.c.l.b16 %v867
        %v1528 = vunpack.c.l.b16 %v868
        %v1529 = vunpack.c.l.b16 %v869
        %v1530 = vunpack.c.l.b16 %v870
        %v1531 = vunpack.c.l.b16 %v871
        %v1532 = vunpack.c.l.b16 %v872
        %v1533 = vunpack.c.l.b16 %v873
        %v1534 = vunpack.c.l.b16 %v874
        %v1535 = vunpack.c.l.b16 %v875
        %v1536 = vunpack.c.l.b16 %v876
        %v1537 = vunpack.c.l.b16 %v877
        %v1538 = vunpack.c.l.b16 %v878
        %v1539 = vunpack.c.l.b16 %v879
        %v1540 = vunpack.c.l.b16 %v880
        %v1541 = vunpack.c.l.b16 %v881
        %v1542 = vunpack.c.l.b16 %v882
        %v1543 = vunpack.c.l.b16 %v883
        %v1544 = vunpack.c.l.b16 %v884
        %v1545 = vunpack.c.l.b16 %v885
        %v1546 = vunpack.c.l.b16 %v886
        %v1547 = vunpack.c.l.b16 %v887
        %v1548 = vunpack.c.l.b16 %v888
        %v1549 = vunpack.c.l.b16 %v889
        %v1550 = vunpack.c.l.b16 %v890
        %v1551 = vunpack.c.l.b16 %v891
        %v1552 = vunpack.c.l.b16 %v892
        %v1553 = vunpack.c.l.b16 %v893
        %v1554 = vunpack.c.l.b16 %v894
        %v1555 = vunpack.c.l.b16 %v895
        %v1556 = vunpack.c.l.b16 %v896
        %v1557 = vunpack.c.l.b16 %v897
        %v1558 = vunpack.c.l.b16 %v898
        %v1559 = vunpack.c.l.b16 %v899
        %v1560 = vunpack.c.l.b16 %v900
        %v1561 = vunpack.c.l.b16 %v901
        %v1562 = vunpack.c.l.b16 %v902
        %v1563 = vunpack.c.l.b16 %v903
        %v1564 = vunpack.c.l.b16 %v904
        %v1565 = vunpack.c.l.b16 %v905
        %v1566 = vunpack.c.l.b16 %v906
        %v1567 = vunpack.c.l.b16 %v907
        %v1568 = vunpack.c.l.b16 %v908
        %v1569 = vunpack.c.l.b16 %v909
        %v1570 = vunpack.c.l.b16 %v910
        %v1571 = vunpack.c.l.b16 %v911
        %v1572 = vunpack.c.l.b16 %v912
        %v1573 = vunpack.c.l.b16 %v913
        %v1574 = vunpack.c.l.b16 %v914
        %v1575 = vunpack.c.l.b16 %v915
        %v1576 = vunpack.c.l.b16 %v916
        %v1577 = vunpack.c.l.b16 %v917
        %v1578 = vunpack.c.l.b16 %v918
        %v1579 = vunpack.c.l.b16 %v919
        %v1580 = vunpack.c.l.b16 %v920
        %v1581 = vunpack.c.l.b16 %v921
        %v1582 = vunpack.c.l.b16 %v922
        %v1583 = vunpack.c.l.b16 %v923
        %v1584 = vunpack.c.l.b16 %v924
        %v1585 = vunpack.c.l.b16 %v925
        %v1586 = vunpack.c.l.b16 %v926
        %v1587 = vunpack.c.l.b16 %v927
        %v1588 = vunpack.c.l.b16 %v928
        %v1589 = vunpack.c.l.b16 %v929
        %v1590 = vunpack.c.l.b16 %v930
        %v1591 = vunpack.c.l.b16 %v931
        %v1592 = vunpack.c.l.b16 %v932
        %v1593 = vunpack.c.l.b16 %v933
        %v1594 = vunpack.c.l.b16 %v934
        %v1595 = vunpack.c.l.b16 %v935
        %v1596 = vunpack.c.l.b16 %v936
        %v1597 = vunpack.c.l.b16 %v937
        %v1598 = vunpack.c.l.b16 %v938
        %v1599 = vunpack.c.l.b16 %v939
        %v1600 = vunpack.c.l.b16 %v940
        %v1601 = vunpack.c.l.b16 %v941
        %v1602 = vunpack.c.l.b16 %v942
        %v1603 = vunpack.c.l.b16 %v943
        %v1604 = vunpack.c.l.b16 %v944
        %v1605 = vunpack.c.l.b16 %v945
        %v1606 = vunpack.c.l.b16 %v946
        %v1607 = vunpack.c.l.b16 %v947
        %v1608 = vunpack.c.l.b16 %v948
        %v1609 = vunpack.c.l.b16 %v949
        %v1610 = vunpack.c.l.b16 %v950
        %v1611 = vunpack.c.l.b16 %v951
        %v1612 = vunpack.c.l.b16 %v952
        %v1613 = vunpack.c.l.b16 %v953
        %v1614 = vunpack.c.l.b16 %v954
        %v1615 = vunpack.c.l.b16 %v955
        %v1616 = vunpack.c.l.b16 %v956
        %v1617 = vunpack.c.l.b16 %v957
        %v1618 = vunpack.c.l.b16 %v958
        %v1619 = vunpack.c.l.b16 %v959
        %v1620 = vunpack.c.l.b16 %v960
        %v1621 = vunpack.c.l.b16 %v961
        %v1622 = vunpack.c.l.b16 %v962
        %v1623 = vunpack.c.l.b16 %v963
        %v1624 = vunpack.c.l.b16 %v964
        %v1625 = vunpack.c.l.b16 %v965
        %v1626 = vunpack.c.l.b16 %v966
        %v1627 = vunpack.c.l.b16 %v967
        %v1628 = vunpack.c.l.b16 %v968
        %v1629 = vunpack.c.l.b16 %v969
        %v1630 = vunpack.c.l.b16 %v970
        %v1631 = vunpack.c.l.b16 %v971
        %v1632 = vunpack.c.l.b16 %v972
        %v1633 = vunpack.c.l.b16 %v973
        %v1634 = vunpack.c.l.b16 %v974
        %v1635 = vunpack.c.l.b16 %v975
        %v1636 = vunpack.c.l.b16 %v976
        %v1637 = vunpack.c.l.b16 %v977
        %v1638 = vpack.c.b16 %v1495, %v1494
        %v1639 = vpack.c.b16 %v1497, %v1496
        %v1640 = vpack.c.b16 %v1499, %v1498
        %v1641 = vpack.c.b16 %v1501, %v1500
        %v1642 = vpack.c.b16 %v1503, %v1502
        %v1643 = vpack.c.b16 %v1505, %v1504
        %v1644 = vpack.c.b16 %v1507, %v1506
        %v1645 = vpack.c.b16 %v1509, %v1508
        %v1646 = vpack.c.b16 %v1511, %v1510
        %v1647 = vpack.c.b16 %v1513, %v1512
        %v1648 = vpack.c.b16 %v1515, %v1514
        %v1649 = vpack.c.b16 %v1517, %v1516
        %v1650 = vpack.c.b16 %v1519, %v1518
        %v1651 = vpack.c.b16 %v1521, %v1520
        %v1652 = vpack.c.b16 %v1523, %v1522
        %v1653 = vpack.c.b16 %v1525, %v1524
        %v1654 = vpack.c.b16 %v1527, %v1526
        %v1655 = vpack.c.b16 %v1529, %v1528
        %v1656 = vpack.c.b16 %v1531, %v1530
        %v1657 = vpack.c.b16 %v1533, %v1532
        %v1658 = vpack.c.b16 %v1535, %v1534
        %v1659 = vpack.c.b16 %v1537, %v1536
        %v1660 = vpack.c.b16 %v1539, %v1538
        %v1661 = vpack.c.b16 %v1541, %v1540
        %v1662 = vpack.c.b16 %v1543, %v1542
        %v1663 = vpack.c.b16 %v1545, %v1544
        %v1664 = vpack.c.b16 %v1547, %v1546
        %v1665 = vpack.c.b16 %v1549, %v1548
        %v1666 = vpack.c.b16 %v1551, %v1550
        %v1667 = vpack.c.b16 %v1553, %v1552
        %v1668 = vpack.c.b16 %v1555, %v1554
        %v1669 = vpack.c.b16 %v1557, %v1556
        %v1670 = vpack.c.b16 %v1559, %v1558
        %v1671 = vpack.c.b16 %v1561, %v1560
        %v1672 = vpack.c.b16 %v1563, %v1562
        %v1673 = vpack.c.b16 %v1565, %v1564
        %v1674 = vpack.c.b16 %v1567, %v1566
        %v1675 = vpack.c.b16 %v1569, %v1568
        %v1676 = vpack.c.b16 %v1571, %v1570
        %v1677 = vpack.c.b16 %v1573, %v1572
        %v1678 = vpack.c.b16 %v1575, %v1574
        %v1679 = vpack.c.b16 %v1577, %v1576
        %v1680 = vpack.c.b16 %v1579, %v1578
        %v1681 = vpack.c.b16 %v1581, %v1580
        %v1682 = vpack.c.b16 %v1583, %v1582
        %v1683 = vpack.c.b16 %v1585, %v1584
        %v1684 = vpack.c.b16 %v1587, %v1586
        %v1685 = vpack.c.b16 %v1589, %v1588
        %v1686 = vpack.c.b16 %v1591, %v1590
        %v1687 = vpack.c.b16 %v1593, %v1592
        %v1688 = vpack.c.b16 %v1595, %v1594
        %v1689 = vpack.c.b16 %v1597, %v1596
        %v1690 = vpack.c.b16 %v1599, %v1598
        %v1691 = vpack.c.b16 %v1601, %v1600
        %v1692 = vpack.c.b16 %v1603, %v1602
        %v1693 = vpack.c.b16 %v1605, %v1604
        %v1694 = vpack.c.b16 %v1607, %v1606
        %v1695 = vpack.c.b16 %v1609, %v1608
        %v1696 = vpack.c.b16 %v1611, %v1610
        %v1697 = vpack.c.b16 %v1613, %v1612
        %v1698 = vpack.c.b16 %v1615, %v1614
        %v1699 = vpack.c.b16 %v1617, %v1616
        %v1700 = vpack.c.b16 %v1619, %v1618
        %v1701 = vpack.c.b16 %v1621, %v1620
        %v1702 = vpack.c.b16 %v1623, %v1622
        %v1703 = vpack.c.b16 %v1625, %v1624
        %v1704 = vpack.c.b16 %v1627, %v1626
        %v1705 = vpack.c.b16 %v1629, %v1628
        %v1706 = vpack.c.b16 %v1631, %v1630
        %v1707 = vpack.c.b16 %v1633, %v1632
        %v1708 = vpack.c.b16 %v1635, %v1634
        %v1709 = vpack.c.b16 %v1637, %v1636
        %1782 = vmatpush.bf16.msra.mxu0 %v1645
        %1783 = vmatpush.bf16.msra.mxu0 %v1644
        %1784 = vmatpush.bf16.msra.mxu0 %v1643
        %1785 = vmatpush.bf16.msra.mxu0 %v1642
        %1786 = vmatpush.bf16.msra.mxu0 %v1641
        %1787 = vmatpush.bf16.msra.mxu0 %v1640
        %1788 = vmatpush.bf16.msra.mxu0 %v1639
        %1789 = vmatpush.bf16.msra.mxu0 %v1638
        %1790 = vmatmul.bf16.gmra.mxu0 %v1206
        %v1791 = vpop.f32.mrf.mxu0
        %v1792 = vadd.f32 %v980, %v1791
        %v1793 = vpop.f32.mrf.mxu0
        %v1794 = vadd.f32 %v980, %v1793
        %1795 = vmatmul.bf16.gmra.mxu0 %v1215
        %v1796 = vpop.f32.mrf.mxu0
        %v1797 = vadd.f32 %v980, %v1796
        %v1798 = vpop.f32.mrf.mxu0
        %v1799 = vadd.f32 %v980, %v1798
        %1800 = vmatmul.bf16.gmra.mxu0 %v1224
        %v1801 = vpop.f32.mrf.mxu0
        %v1802 = vadd.f32 %v980, %v1801
        %v1803 = vpop.f32.mrf.mxu0
        %v1804 = vadd.f32 %v980, %v1803
        %1805 = vmatmul.bf16.gmra.mxu0 %v1233
        %v1806 = vpop.f32.mrf.mxu0
        %v1807 = vadd.f32 %v980, %v1806
        %v1808 = vpop.f32.mrf.mxu0
        %v1809 = vadd.f32 %v980, %v1808
        %1810 = vmatmul.bf16.gmra.mxu0 %v1242
        %v1811 = vpop.f32.mrf.mxu0
        %v1812 = vadd.f32 %v980, %v1811
        %v1813 = vpop.f32.mrf.mxu0
        %v1814 = vadd.f32 %v980, %v1813
        %1815 = vmatmul.bf16.gmra.mxu0 %v1251
        %v1816 = vpop.f32.mrf.mxu0
        %v1817 = vadd.f32 %v980, %v1816
        %v1818 = vpop.f32.mrf.mxu0
        %v1819 = vadd.f32 %v980, %v1818
        %1820 = vmatmul.bf16.gmra.mxu0 %v1260
        %v1821 = vpop.f32.mrf.mxu0
        %v1822 = vadd.f32 %v980, %v1821
        %v1823 = vpop.f32.mrf.mxu0
        %v1824 = vadd.f32 %v980, %v1823
        %1825 = vmatmul.bf16.gmra.mxu0 %v1269
        %v1826 = vpop.f32.mrf.mxu0
        %v1827 = vadd.f32 %v980, %v1826
        %v1828 = vpop.f32.mrf.mxu0
        %v1829 = vadd.f32 %v980, %v1828
        %1830 = vdwg.mxu0
        %1831 = vmatpush.bf16.msra.mxu0 %v1653
        %1832 = vmatpush.bf16.msra.mxu0 %v1652
        %1833 = vmatpush.bf16.msra.mxu0 %v1651
        %1834 = vmatpush.bf16.msra.mxu0 %v1650
        %1835 = vmatpush.bf16.msra.mxu0 %v1649
        %1836 = vmatpush.bf16.msra.mxu0 %v1648
        %1837 = vmatpush.bf16.msra.mxu0 %v1647
        %1838 = vmatpush.bf16.msra.mxu0 %v1646
        %1839 = vmatmul.bf16.gmra.mxu0 %v1207
        %v1840 = vpop.f32.mrf.mxu0
        %v1841 = vadd.f32 %v1792, %v1840
        %v1842 = vpop.f32.mrf.mxu0
        %v1843 = vadd.f32 %v1794, %v1842
        %1844 = vmatmul.bf16.gmra.mxu0 %v1216
        %v1845 = vpop.f32.mrf.mxu0
        %v1846 = vadd.f32 %v1797, %v1845
        %v1847 = vpop.f32.mrf.mxu0
        %v1848 = vadd.f32 %v1799, %v1847
        %1849 = vmatmul.bf16.gmra.mxu0 %v1225
        %v1850 = vpop.f32.mrf.mxu0
        %v1851 = vadd.f32 %v1802, %v1850
        %v1852 = vpop.f32.mrf.mxu0
        %v1853 = vadd.f32 %v1804, %v1852
        %1854 = vmatmul.bf16.gmra.mxu0 %v1234
        %v1855 = vpop.f32.mrf.mxu0
        %v1856 = vadd.f32 %v1807, %v1855
        %v1857 = vpop.f32.mrf.mxu0
        %v1858 = vadd.f32 %v1809, %v1857
        %1859 = vmatmul.bf16.gmra.mxu0 %v1243
        %v1860 = vpop.f32.mrf.mxu0
        %v1861 = vadd.f32 %v1812, %v1860
        %v1862 = vpop.f32.mrf.mxu0
        %v1863 = vadd.f32 %v1814, %v1862
        %1864 = vmatmul.bf16.gmra.mxu0 %v1252
        %v1865 = vpop.f32.mrf.mxu0
        %v1866 = vadd.f32 %v1817, %v1865
        %v1867 = vpop.f32.mrf.mxu0
        %v1868 = vadd.f32 %v1819, %v1867
        %1869 = vmatmul.bf16.gmra.mxu0 %v1261
        %v1870 = vpop.f32.mrf.mxu0
        %v1871 = vadd.f32 %v1822, %v1870
        %v1872 = vpop.f32.mrf.mxu0
        %v1873 = vadd.f32 %v1824, %v1872
        %1874 = vmatmul.bf16.gmra.mxu0 %v1270
        %v1875 = vpop.f32.mrf.mxu0
        %v1876 = vadd.f32 %v1827, %v1875
        %v1877 = vpop.f32.mrf.mxu0
        %v1878 = vadd.f32 %v1829, %v1877
        %1879 = vdwg.mxu0
        %1880 = vmatpush.bf16.msra.mxu0 %v1661
        %1881 = vmatpush.bf16.msra.mxu0 %v1660
        %1882 = vmatpush.bf16.msra.mxu0 %v1659
        %1883 = vmatpush.bf16.msra.mxu0 %v1658
        %1884 = vmatpush.bf16.msra.mxu0 %v1657
        %1885 = vmatpush.bf16.msra.mxu0 %v1656
        %1886 = vmatpush.bf16.msra.mxu0 %v1655
        %1887 = vmatpush.bf16.msra.mxu0 %v1654
        %1888 = vmatmul.bf16.gmra.mxu0 %v1208
        %v1889 = vpop.f32.mrf.mxu0
        %v1890 = vadd.f32 %v1841, %v1889
        %v1891 = vpop.f32.mrf.mxu0
        %v1892 = vadd.f32 %v1843, %v1891
        %1893 = vmatmul.bf16.gmra.mxu0 %v1217
        %v1894 = vpop.f32.mrf.mxu0
        %v1895 = vadd.f32 %v1846, %v1894
        %v1896 = vpop.f32.mrf.mxu0
        %v1897 = vadd.f32 %v1848, %v1896
        %1898 = vmatmul.bf16.gmra.mxu0 %v1226
        %v1899 = vpop.f32.mrf.mxu0
        %v1900 = vadd.f32 %v1851, %v1899
        %v1901 = vpop.f32.mrf.mxu0
        %v1902 = vadd.f32 %v1853, %v1901
        %1903 = vmatmul.bf16.gmra.mxu0 %v1235
        %v1904 = vpop.f32.mrf.mxu0
        %v1905 = vadd.f32 %v1856, %v1904
        %v1906 = vpop.f32.mrf.mxu0
        %v1907 = vadd.f32 %v1858, %v1906
        %1908 = vmatmul.bf16.gmra.mxu0 %v1244
        %v1909 = vpop.f32.mrf.mxu0
        %v1910 = vadd.f32 %v1861, %v1909
        %v1911 = vpop.f32.mrf.mxu0
        %v1912 = vadd.f32 %v1863, %v1911
        %1913 = vmatmul.bf16.gmra.mxu0 %v1253
        %v1914 = vpop.f32.mrf.mxu0
        %v1915 = vadd.f32 %v1866, %v1914
        %v1916 = vpop.f32.mrf.mxu0
        %v1917 = vadd.f32 %v1868, %v1916
        %1918 = vmatmul.bf16.gmra.mxu0 %v1262
        %v1919 = vpop.f32.mrf.mxu0
        %v1920 = vadd.f32 %v1871, %v1919
        %v1921 = vpop.f32.mrf.mxu0
        %v1922 = vadd.f32 %v1873, %v1921
        %1923 = vmatmul.bf16.gmra.mxu0 %v1271
        %v1924 = vpop.f32.mrf.mxu0
        %v1925 = vadd.f32 %v1876, %v1924
        %v1926 = vpop.f32.mrf.mxu0
        %v1927 = vadd.f32 %v1878, %v1926
        %1928 = vdwg.mxu0
        %1929 = vmatpush.bf16.msra.mxu0 %v1669
        %1930 = vmatpush.bf16.msra.mxu0 %v1668
        %1931 = vmatpush.bf16.msra.mxu0 %v1667
        %1932 = vmatpush.bf16.msra.mxu0 %v1666
        %1933 = vmatpush.bf16.msra.mxu0 %v1665
        %1934 = vmatpush.bf16.msra.mxu0 %v1664
        %1935 = vmatpush.bf16.msra.mxu0 %v1663
        %1936 = vmatpush.bf16.msra.mxu0 %v1662
        %1937 = vmatmul.bf16.gmra.mxu0 %v1209
        %v1938 = vpop.f32.mrf.mxu0
        %v1939 = vadd.f32 %v1890, %v1938
        %v1940 = vpop.f32.mrf.mxu0
        %v1941 = vadd.f32 %v1892, %v1940
        %1942 = vmatmul.bf16.gmra.mxu0 %v1218
        %v1943 = vpop.f32.mrf.mxu0
        %v1944 = vadd.f32 %v1895, %v1943
        %v1945 = vpop.f32.mrf.mxu0
        %v1946 = vadd.f32 %v1897, %v1945
        %1947 = vmatmul.bf16.gmra.mxu0 %v1227
        %v1948 = vpop.f32.mrf.mxu0
        %v1949 = vadd.f32 %v1900, %v1948
        %v1950 = vpop.f32.mrf.mxu0
        %v1951 = vadd.f32 %v1902, %v1950
        %1952 = vmatmul.bf16.gmra.mxu0 %v1236
        %v1953 = vpop.f32.mrf.mxu0
        %v1954 = vadd.f32 %v1905, %v1953
        %v1955 = vpop.f32.mrf.mxu0
        %v1956 = vadd.f32 %v1907, %v1955
        %1957 = vmatmul.bf16.gmra.mxu0 %v1245
        %v1958 = vpop.f32.mrf.mxu0
        %v1959 = vadd.f32 %v1910, %v1958
        %v1960 = vpop.f32.mrf.mxu0
        %v1961 = vadd.f32 %v1912, %v1960
        %1962 = vmatmul.bf16.gmra.mxu0 %v1254
        %v1963 = vpop.f32.mrf.mxu0
        %v1964 = vadd.f32 %v1915, %v1963
        %v1965 = vpop.f32.mrf.mxu0
        %v1966 = vadd.f32 %v1917, %v1965
        %1967 = vmatmul.bf16.gmra.mxu0 %v1263
        %v1968 = vpop.f32.mrf.mxu0
        %v1969 = vadd.f32 %v1920, %v1968
        %v1970 = vpop.f32.mrf.mxu0
        %v1971 = vadd.f32 %v1922, %v1970
        %1972 = vmatmul.bf16.gmra.mxu0 %v1272
        %v1973 = vpop.f32.mrf.mxu0
        %v1974 = vadd.f32 %v1925, %v1973
        %v1975 = vpop.f32.mrf.mxu0
        %v1976 = vadd.f32 %v1927, %v1975
        %1977 = vdwg.mxu0
        %1978 = vmatpush.bf16.msra.mxu0 %v1677
        %1979 = vmatpush.bf16.msra.mxu0 %v1676
        %1980 = vmatpush.bf16.msra.mxu0 %v1675
        %1981 = vmatpush.bf16.msra.mxu0 %v1674
        %1982 = vmatpush.bf16.msra.mxu0 %v1673
        %1983 = vmatpush.bf16.msra.mxu0 %v1672
        %1984 = vmatpush.bf16.msra.mxu0 %v1671
        %1985 = vmatpush.bf16.msra.mxu0 %v1670
        %1986 = vmatmul.bf16.gmra.mxu0 %v1210
        %v1987 = vpop.f32.mrf.mxu0
        %v1988 = vadd.f32 %v1939, %v1987
        %v1989 = vpop.f32.mrf.mxu0
        %v1990 = vadd.f32 %v1941, %v1989
        %1991 = vmatmul.bf16.gmra.mxu0 %v1219
        %v1992 = vpop.f32.mrf.mxu0
        %v1993 = vadd.f32 %v1944, %v1992
        %v1994 = vpop.f32.mrf.mxu0
        %v1995 = vadd.f32 %v1946, %v1994
        %1996 = vmatmul.bf16.gmra.mxu0 %v1228
        %v1997 = vpop.f32.mrf.mxu0
        %v1998 = vadd.f32 %v1949, %v1997
        %v1999 = vpop.f32.mrf.mxu0
        %v2000 = vadd.f32 %v1951, %v1999
        %2001 = vmatmul.bf16.gmra.mxu0 %v1237
        %v2002 = vpop.f32.mrf.mxu0
        %v2003 = vadd.f32 %v1954, %v2002
        %v2004 = vpop.f32.mrf.mxu0
        %v2005 = vadd.f32 %v1956, %v2004
        %2006 = vmatmul.bf16.gmra.mxu0 %v1246
        %v2007 = vpop.f32.mrf.mxu0
        %v2008 = vadd.f32 %v1959, %v2007
        %v2009 = vpop.f32.mrf.mxu0
        %v2010 = vadd.f32 %v1961, %v2009
        %2011 = vmatmul.bf16.gmra.mxu0 %v1255
        %v2012 = vpop.f32.mrf.mxu0
        %v2013 = vadd.f32 %v1964, %v2012
        %v2014 = vpop.f32.mrf.mxu0
        %v2015 = vadd.f32 %v1966, %v2014
        %2016 = vmatmul.bf16.gmra.mxu0 %v1264
        %v2017 = vpop.f32.mrf.mxu0
        %v2018 = vadd.f32 %v1969, %v2017
        %v2019 = vpop.f32.mrf.mxu0
        %v2020 = vadd.f32 %v1971, %v2019
        %2021 = vmatmul.bf16.gmra.mxu0 %v1273
        %v2022 = vpop.f32.mrf.mxu0
        %v2023 = vadd.f32 %v1974, %v2022
        %v2024 = vpop.f32.mrf.mxu0
        %v2025 = vadd.f32 %v1976, %v2024
        %2026 = vdwg.mxu0
        %2027 = vmatpush.bf16.msra.mxu0 %v1685
        %2028 = vmatpush.bf16.msra.mxu0 %v1684
        %2029 = vmatpush.bf16.msra.mxu0 %v1683
        %2030 = vmatpush.bf16.msra.mxu0 %v1682
        %2031 = vmatpush.bf16.msra.mxu0 %v1681
        %2032 = vmatpush.bf16.msra.mxu0 %v1680
        %2033 = vmatpush.bf16.msra.mxu0 %v1679
        %2034 = vmatpush.bf16.msra.mxu0 %v1678
        %2035 = vmatmul.bf16.gmra.mxu0 %v1211
        %v2036 = vpop.f32.mrf.mxu0
        %v2037 = vadd.f32 %v1988, %v2036
        %v2038 = vpop.f32.mrf.mxu0
        %v2039 = vadd.f32 %v1990, %v2038
        %2040 = vmatmul.bf16.gmra.mxu0 %v1220
        %v2041 = vpop.f32.mrf.mxu0
        %v2042 = vadd.f32 %v1993, %v2041
        %v2043 = vpop.f32.mrf.mxu0
        %v2044 = vadd.f32 %v1995, %v2043
        %2045 = vmatmul.bf16.gmra.mxu0 %v1229
        %v2046 = vpop.f32.mrf.mxu0
        %v2047 = vadd.f32 %v1998, %v2046
        %v2048 = vpop.f32.mrf.mxu0
        %v2049 = vadd.f32 %v2000, %v2048
        %2050 = vmatmul.bf16.gmra.mxu0 %v1238
        %v2051 = vpop.f32.mrf.mxu0
        %v2052 = vadd.f32 %v2003, %v2051
        %v2053 = vpop.f32.mrf.mxu0
        %v2054 = vadd.f32 %v2005, %v2053
        %2055 = vmatmul.bf16.gmra.mxu0 %v1247
        %v2056 = vpop.f32.mrf.mxu0
        %v2057 = vadd.f32 %v2008, %v2056
        %v2058 = vpop.f32.mrf.mxu0
        %v2059 = vadd.f32 %v2010, %v2058
        %2060 = vmatmul.bf16.gmra.mxu0 %v1256
        %v2061 = vpop.f32.mrf.mxu0
        %v2062 = vadd.f32 %v2013, %v2061
        %v2063 = vpop.f32.mrf.mxu0
        %v2064 = vadd.f32 %v2015, %v2063
        %2065 = vmatmul.bf16.gmra.mxu0 %v1265
        %v2066 = vpop.f32.mrf.mxu0
        %v2067 = vadd.f32 %v2018, %v2066
        %v2068 = vpop.f32.mrf.mxu0
        %v2069 = vadd.f32 %v2020, %v2068
        %2070 = vmatmul.bf16.gmra.mxu0 %v1274
        %v2071 = vpop.f32.mrf.mxu0
        %v2072 = vadd.f32 %v2023, %v2071
        %v2073 = vpop.f32.mrf.mxu0
        %v2074 = vadd.f32 %v2025, %v2073
        %2075 = vdwg.mxu0
        %2076 = vmatpush.bf16.msra.mxu0 %v1693
        %2077 = vmatpush.bf16.msra.mxu0 %v1692
        %2078 = vmatpush.bf16.msra.mxu0 %v1691
        %2079 = vmatpush.bf16.msra.mxu0 %v1690
        %2080 = vmatpush.bf16.msra.mxu0 %v1689
        %2081 = vmatpush.bf16.msra.mxu0 %v1688
        %2082 = vmatpush.bf16.msra.mxu0 %v1687
        %2083 = vmatpush.bf16.msra.mxu0 %v1686
        %2084 = vmatmul.bf16.gmra.mxu0 %v1212
        %v2085 = vpop.f32.mrf.mxu0
        %v2086 = vadd.f32 %v2037, %v2085
        %v2087 = vpop.f32.mrf.mxu0
        %v2088 = vadd.f32 %v2039, %v2087
        %2089 = vmatmul.bf16.gmra.mxu0 %v1221
        %v2090 = vpop.f32.mrf.mxu0
        %v2091 = vadd.f32 %v2042, %v2090
        %v2092 = vpop.f32.mrf.mxu0
        %v2093 = vadd.f32 %v2044, %v2092
        %2094 = vmatmul.bf16.gmra.mxu0 %v1230
        %v2095 = vpop.f32.mrf.mxu0
        %v2096 = vadd.f32 %v2047, %v2095
        %v2097 = vpop.f32.mrf.mxu0
        %v2098 = vadd.f32 %v2049, %v2097
        %2099 = vmatmul.bf16.gmra.mxu0 %v1239
        %v2100 = vpop.f32.mrf.mxu0
        %v2101 = vadd.f32 %v2052, %v2100
        %v2102 = vpop.f32.mrf.mxu0
        %v2103 = vadd.f32 %v2054, %v2102
        %2104 = vmatmul.bf16.gmra.mxu0 %v1248
        %v2105 = vpop.f32.mrf.mxu0
        %v2106 = vadd.f32 %v2057, %v2105
        %v2107 = vpop.f32.mrf.mxu0
        %v2108 = vadd.f32 %v2059, %v2107
        %2109 = vmatmul.bf16.gmra.mxu0 %v1257
        %v2110 = vpop.f32.mrf.mxu0
        %v2111 = vadd.f32 %v2062, %v2110
        %v2112 = vpop.f32.mrf.mxu0
        %v2113 = vadd.f32 %v2064, %v2112
        %2114 = vmatmul.bf16.gmra.mxu0 %v1266
        %v2115 = vpop.f32.mrf.mxu0
        %v2116 = vadd.f32 %v2067, %v2115
        %v2117 = vpop.f32.mrf.mxu0
        %v2118 = vadd.f32 %v2069, %v2117
        %2119 = vmatmul.bf16.gmra.mxu0 %v1275
        %v2120 = vpop.f32.mrf.mxu0
        %v2121 = vadd.f32 %v2072, %v2120
        %v2122 = vpop.f32.mrf.mxu0
        %v2123 = vadd.f32 %v2074, %v2122
        %2124 = vdwg.mxu0
        %2125 = vmatpush.bf16.msra.mxu0 %v1701
        %2126 = vmatpush.bf16.msra.mxu0 %v1700
        %2127 = vmatpush.bf16.msra.mxu0 %v1699
        %2128 = vmatpush.bf16.msra.mxu0 %v1698
        %2129 = vmatpush.bf16.msra.mxu0 %v1697
        %2130 = vmatpush.bf16.msra.mxu0 %v1696
        %2131 = vmatpush.bf16.msra.mxu0 %v1695
        %2132 = vmatpush.bf16.msra.mxu0 %v1694
        %2133 = vmatmul.bf16.gmra.mxu0 %v1213
        %v2134 = vpop.f32.mrf.mxu0
        %v2135 = vadd.f32 %v2086, %v2134
        %v2136 = vpop.f32.mrf.mxu0
        %v2137 = vadd.f32 %v2088, %v2136
        %2138 = vmatmul.bf16.gmra.mxu0 %v1222
        %v2139 = vpop.f32.mrf.mxu0
        %v2140 = vadd.f32 %v2091, %v2139
        %v2141 = vpop.f32.mrf.mxu0
        %v2142 = vadd.f32 %v2093, %v2141
        %2143 = vmatmul.bf16.gmra.mxu0 %v1231
        %v2144 = vpop.f32.mrf.mxu0
        %v2145 = vadd.f32 %v2096, %v2144
        %v2146 = vpop.f32.mrf.mxu0
        %v2147 = vadd.f32 %v2098, %v2146
        %2148 = vmatmul.bf16.gmra.mxu0 %v1240
        %v2149 = vpop.f32.mrf.mxu0
        %v2150 = vadd.f32 %v2101, %v2149
        %v2151 = vpop.f32.mrf.mxu0
        %v2152 = vadd.f32 %v2103, %v2151
        %2153 = vmatmul.bf16.gmra.mxu0 %v1249
        %v2154 = vpop.f32.mrf.mxu0
        %v2155 = vadd.f32 %v2106, %v2154
        %v2156 = vpop.f32.mrf.mxu0
        %v2157 = vadd.f32 %v2108, %v2156
        %2158 = vmatmul.bf16.gmra.mxu0 %v1258
        %v2159 = vpop.f32.mrf.mxu0
        %v2160 = vadd.f32 %v2111, %v2159
        %v2161 = vpop.f32.mrf.mxu0
        %v2162 = vadd.f32 %v2113, %v2161
        %2163 = vmatmul.bf16.gmra.mxu0 %v1267
        %v2164 = vpop.f32.mrf.mxu0
        %v2165 = vadd.f32 %v2116, %v2164
        %v2166 = vpop.f32.mrf.mxu0
        %v2167 = vadd.f32 %v2118, %v2166
        %2168 = vmatmul.bf16.gmra.mxu0 %v1276
        %v2169 = vpop.f32.mrf.mxu0
        %v2170 = vadd.f32 %v2121, %v2169
        %v2171 = vpop.f32.mrf.mxu0
        %v2172 = vadd.f32 %v2123, %v2171
        %2173 = vdwg.mxu0
        %2174 = vmatpush.bf16.msra.mxu0 %v1709
        %2175 = vmatpush.bf16.msra.mxu0 %v1708
        %2176 = vmatpush.bf16.msra.mxu0 %v1707
        %2177 = vmatpush.bf16.msra.mxu0 %v1706
        %2178 = vmatpush.bf16.msra.mxu0 %v1705
        %2179 = vmatpush.bf16.msra.mxu0 %v1704
        %2180 = vmatpush.bf16.msra.mxu0 %v1703
        %2181 = vmatpush.bf16.msra.mxu0 %v1702
        %2182 = vmatmul.bf16.gmra.mxu0 %v1214
        %v2183 = vpop.f32.mrf.mxu0
        %v2184 = vadd.f32 %v2135, %v2183
        %v2185 = vpop.f32.mrf.mxu0
        %v2186 = vadd.f32 %v2137, %v2185
        %2187 = vmatmul.bf16.gmra.mxu0 %v1223
        %v2188 = vpop.f32.mrf.mxu0
        %v2189 = vadd.f32 %v2140, %v2188
        %v2190 = vpop.f32.mrf.mxu0
        %v2191 = vadd.f32 %v2142, %v2190
        %2192 = vmatmul.bf16.gmra.mxu0 %v1232
        %v2193 = vpop.f32.mrf.mxu0
        %v2194 = vadd.f32 %v2145, %v2193
        %v2195 = vpop.f32.mrf.mxu0
        %v2196 = vadd.f32 %v2147, %v2195
        %2197 = vmatmul.bf16.gmra.mxu0 %v1241
        %v2198 = vpop.f32.mrf.mxu0
        %v2199 = vadd.f32 %v2150, %v2198
        %v2200 = vpop.f32.mrf.mxu0
        %v2201 = vadd.f32 %v2152, %v2200
        %2202 = vmatmul.bf16.gmra.mxu0 %v1250
        %v2203 = vpop.f32.mrf.mxu0
        %v2204 = vadd.f32 %v2155, %v2203
        %v2205 = vpop.f32.mrf.mxu0
        %v2206 = vadd.f32 %v2157, %v2205
        %2207 = vmatmul.bf16.gmra.mxu0 %v1259
        %v2208 = vpop.f32.mrf.mxu0
        %v2209 = vadd.f32 %v2160, %v2208
        %v2210 = vpop.f32.mrf.mxu0
        %v2211 = vadd.f32 %v2162, %v2210
        %2212 = vmatmul.bf16.gmra.mxu0 %v1268
        %v2213 = vpop.f32.mrf.mxu0
        %v2214 = vadd.f32 %v2165, %v2213
        %v2215 = vpop.f32.mrf.mxu0
        %v2216 = vadd.f32 %v2167, %v2215
        %2217 = vmatmul.bf16.gmra.mxu0 %v1277
        %v2218 = vpop.f32.mrf.mxu0
        %v2219 = vadd.f32 %v2170, %v2218
        %v2220 = vpop.f32.mrf.mxu0
        %v2221 = vadd.f32 %v2172, %v2220
        %2222 = vdwg.mxu0
        %2223 = vxpose.xlu0.b32.start [1/16] %v2184, 128
        %2224 = vxpose.xlu0.b32.cont [2/16] %v2186, 128
        %2225 = vxpose.xlu0.b32.cont [3/16] %v2189, 128
        %2226 = vxpose.xlu0.b32.cont [4/16] %v2191, 128
        %2227 = vxpose.xlu0.b32.cont [5/16] %v2194, 128
        %2228 = vxpose.xlu0.b32.cont [6/16] %v2196, 128
        %2229 = vxpose.xlu0.b32.cont [7/16] %v2199, 128
        %2230 = vxpose.xlu0.b32.cont [8/16] %v2201, 128
        %2231 = vxpose.xlu0.b32.cont [9/16] %v2204, 128
        %2232 = vxpose.xlu0.b32.cont [10/16] %v2206, 128
        %2233 = vxpose.xlu0.b32.cont [11/16] %v2209, 128
        %2234 = vxpose.xlu0.b32.cont [12/16] %v2211, 128
        %2235 = vxpose.xlu0.b32.cont [13/16] %v2214, 128
        %2236 = vxpose.xlu0.b32.cont [14/16] %v2216, 128
        %2237 = vxpose.xlu0.b32.cont [15/16] %v2219, 128
        %2238 = vxpose.xlu0.b32.end [16/16] %v2221, 128
        %v2239 = vpop.trf.xlu0
        %v2240 = vpop.trf.xlu0
        %v2241 = vpop.trf.xlu0
        %v2242 = vpop.trf.xlu0
        %v2243 = vpop.trf.xlu0
        %v2244 = vpop.trf.xlu0
        %v2245 = vpop.trf.xlu0
        %v2246 = vpop.trf.xlu0
        %v2247 = vpop.trf.xlu0
        %v2248 = vpop.trf.xlu0
        %v2249 = vpop.trf.xlu0
        %v2250 = vpop.trf.xlu0
        %v2251 = vpop.trf.xlu0
        %v2252 = vpop.trf.xlu0
        %v2253 = vpop.trf.xlu0
        %v2254 = vpop.trf.xlu0
        %v2255 = vxor.u32 %v2239, 2147483648
        %v2256 = vxor.u32 %v2240, 2147483648
        %v2257 = vxor.u32 %v2241, 2147483648
        %v2258 = vxor.u32 %v2242, 2147483648
        %v2259 = vxor.u32 %v2243, 2147483648
        %v2260 = vxor.u32 %v2244, 2147483648
        %v2261 = vxor.u32 %v2245, 2147483648
        %v2262 = vxor.u32 %v2246, 2147483648
        %v2263 = vxor.u32 %v2247, 2147483648
        %v2264 = vxor.u32 %v2248, 2147483648
        %v2265 = vxor.u32 %v2249, 2147483648
        %v2266 = vxor.u32 %v2250, 2147483648
        %v2267 = vmul.f32 %v2255, 1.442695
        %v2268 = vpow.pop %v2267
        %v2269 = vmul.f32 %v2256, 1.442695
        %v2270 = vpow.pop %v2269
        %v2271 = vmul.f32 %v2257, 1.442695
        %v2272 = vpow.pop %v2271
        %v2273 = vmul.f32 %v2258, 1.442695
        %v2274 = vpow.pop %v2273
        %v2275 = vmul.f32 %v2259, 1.442695
        %v2276 = vpow.pop %v2275
        %v2277 = vmul.f32 %v2260, 1.442695
        %v2278 = vpow.pop %v2277
        %v2279 = vmul.f32 %v2261, 1.442695
        %v2280 = vpow.pop %v2279
        %v2281 = vmul.f32 %v2262, 1.442695
        %v2282 = vpow.pop %v2281
        %v2283 = vmul.f32 %v2263, 1.442695
        %v2284 = vpow.pop %v2283
        %v2285 = vmul.f32 %v2264, 1.442695
        %v2286 = vpow.pop %v2285
        %v2287 = vmul.f32 %v2265, 1.442695
        %v2288 = vpow.pop %v2287
        %v2289 = vmul.f32 %v2266, 1.442695
        %v2290 = vpow.pop %v2289
        %v2291 = vadd.f32 %v2268, 1.0
        %v2292 = vadd.f32 %v2270, 1.0
        %v2293 = vadd.f32 %v2272, 1.0
        %v2294 = vadd.f32 %v2274, 1.0
        %v2295 = vadd.f32 %v2276, 1.0
        %v2296 = vadd.f32 %v2278, 1.0
        %v2297 = vadd.f32 %v2280, 1.0
        %v2298 = vadd.f32 %v2282, 1.0
        %v2299 = vadd.f32 %v2284, 1.0
        %v2300 = vadd.f32 %v2286, 1.0
        %v2301 = vadd.f32 %v2288, 1.0
        %v2302 = vadd.f32 %v2290, 1.0
        %v2303 = vrcp.pop %v2291
        %v2304 = vmul.f32 %v2291, %v2303
        %v2305 = vsub.f32 1.0, %v2304
        %v2306 = vmul.f32 %v2303, %v2305
        %v2307 = vadd.f32 %v2303, %v2306
        %vm2308 = vweird.f32 %v2291
        %vm2309 = vweird.f32 %v2303
        %vm2310 = vmor %vm2308, %vm2309
        %v2311 = vsel %vm2310, %v2303, %v2307
        %v2312 = vand.u32 2147483647, %v2291
        %vm2313 = vcmp.eq.f32.partialorder %v2312, 8.507059e+37
        %v2314 = vand.u32 %v2291, 2147483648
        %v2315 = vor.u32 1.1754944e-38, %v2314
        %v2316 = vsel %vm2313, %v2315, %v2311
        %v2317 = vmul.f32 1.0, %v2316
        %v2318 = vrcp.pop %v2292
        %v2319 = vmul.f32 %v2292, %v2318
        %v2320 = vsub.f32 1.0, %v2319
        %v2321 = vmul.f32 %v2318, %v2320
        %v2322 = vadd.f32 %v2318, %v2321
        %vm2323 = vweird.f32 %v2292
        %vm2324 = vweird.f32 %v2318
        %vm2325 = vmor %vm2323, %vm2324
        %v2326 = vsel %vm2325, %v2318, %v2322
        %v2327 = vand.u32 2147483647, %v2292
        %vm2328 = vcmp.eq.f32.partialorder %v2327, 8.507059e+37
        %v2329 = vand.u32 %v2292, 2147483648
        %v2330 = vor.u32 1.1754944e-38, %v2329
        %v2331 = vsel %vm2328, %v2330, %v2326
        %v2332 = vmul.f32 1.0, %v2331
        %v2333 = vrcp.pop %v2293
        %v2334 = vmul.f32 %v2293, %v2333
        %v2335 = vsub.f32 1.0, %v2334
        %v2336 = vmul.f32 %v2333, %v2335
        %v2337 = vadd.f32 %v2333, %v2336
        %vm2338 = vweird.f32 %v2293
        %vm2339 = vweird.f32 %v2333
        %vm2340 = vmor %vm2338, %vm2339
        %v2341 = vsel %vm2340, %v2333, %v2337
        %v2342 = vand.u32 2147483647, %v2293
        %vm2343 = vcmp.eq.f32.partialorder %v2342, 8.507059e+37
        %v2344 = vand.u32 %v2293, 2147483648
        %v2345 = vor.u32 1.1754944e-38, %v2344
        %v2346 = vsel %vm2343, %v2345, %v2341
        %v2347 = vmul.f32 1.0, %v2346
        %v2348 = vrcp.pop %v2294
        %v2349 = vmul.f32 %v2294, %v2348
        %v2350 = vsub.f32 1.0, %v2349
        %v2351 = vmul.f32 %v2348, %v2350
        %v2352 = vadd.f32 %v2348, %v2351
        %vm2353 = vweird.f32 %v2294
        %vm2354 = vweird.f32 %v2348
        %vm2355 = vmor %vm2353, %vm2354
        %v2356 = vsel %vm2355, %v2348, %v2352
        %v2357 = vand.u32 2147483647, %v2294
        %vm2358 = vcmp.eq.f32.partialorder %v2357, 8.507059e+37
        %v2359 = vand.u32 %v2294, 2147483648
        %v2360 = vor.u32 1.1754944e-38, %v2359
        %v2361 = vsel %vm2358, %v2360, %v2356
        %v2362 = vmul.f32 1.0, %v2361
        %v2363 = vrcp.pop %v2295
        %v2364 = vmul.f32 %v2295, %v2363
        %v2365 = vsub.f32 1.0, %v2364
        %v2366 = vmul.f32 %v2363, %v2365
        %v2367 = vadd.f32 %v2363, %v2366
        %vm2368 = vweird.f32 %v2295
        %vm2369 = vweird.f32 %v2363
        %vm2370 = vmor %vm2368, %vm2369
        %v2371 = vsel %vm2370, %v2363, %v2367
        %v2372 = vand.u32 2147483647, %v2295
        %vm2373 = vcmp.eq.f32.partialorder %v2372, 8.507059e+37
        %v2374 = vand.u32 %v2295, 2147483648
        %v2375 = vor.u32 1.1754944e-38, %v2374
        %v2376 = vsel %vm2373, %v2375, %v2371
        %v2377 = vmul.f32 1.0, %v2376
        %v2378 = vrcp.pop %v2296
        %v2379 = vmul.f32 %v2296, %v2378
        %v2380 = vsub.f32 1.0, %v2379
        %v2381 = vmul.f32 %v2378, %v2380
        %v2382 = vadd.f32 %v2378, %v2381
        %vm2383 = vweird.f32 %v2296
        %vm2384 = vweird.f32 %v2378
        %vm2385 = vmor %vm2383, %vm2384
        %v2386 = vsel %vm2385, %v2378, %v2382
        %v2387 = vand.u32 2147483647, %v2296
        %vm2388 = vcmp.eq.f32.partialorder %v2387, 8.507059e+37
        %v2389 = vand.u32 %v2296, 2147483648
        %v2390 = vor.u32 1.1754944e-38, %v2389
        %v2391 = vsel %vm2388, %v2390, %v2386
        %v2392 = vmul.f32 1.0, %v2391
        %v2393 = vrcp.pop %v2297
        %v2394 = vmul.f32 %v2297, %v2393
        %v2395 = vsub.f32 1.0, %v2394
        %v2396 = vmul.f32 %v2393, %v2395
        %v2397 = vadd.f32 %v2393, %v2396
        %vm2398 = vweird.f32 %v2297
        %vm2399 = vweird.f32 %v2393
        %vm2400 = vmor %vm2398, %vm2399
        %v2401 = vsel %vm2400, %v2393, %v2397
        %v2402 = vand.u32 2147483647, %v2297
        %vm2403 = vcmp.eq.f32.partialorder %v2402, 8.507059e+37
        %v2404 = vand.u32 %v2297, 2147483648
        %v2405 = vor.u32 1.1754944e-38, %v2404
        %v2406 = vsel %vm2403, %v2405, %v2401
        %v2407 = vmul.f32 1.0, %v2406
        %v2408 = vrcp.pop %v2298
        %v2409 = vmul.f32 %v2298, %v2408
        %v2410 = vsub.f32 1.0, %v2409
        %v2411 = vmul.f32 %v2408, %v2410
        %v2412 = vadd.f32 %v2408, %v2411
        %vm2413 = vweird.f32 %v2298
        %vm2414 = vweird.f32 %v2408
        %vm2415 = vmor %vm2413, %vm2414
        %v2416 = vsel %vm2415, %v2408, %v2412
        %v2417 = vand.u32 2147483647, %v2298
        %vm2418 = vcmp.eq.f32.partialorder %v2417, 8.507059e+37
        %v2419 = vand.u32 %v2298, 2147483648
        %v2420 = vor.u32 1.1754944e-38, %v2419
        %v2421 = vsel %vm2418, %v2420, %v2416
        %v2422 = vmul.f32 1.0, %v2421
        %v2423 = vrcp.pop %v2299
        %v2424 = vmul.f32 %v2299, %v2423
        %v2425 = vsub.f32 1.0, %v2424
        %v2426 = vmul.f32 %v2423, %v2425
        %v2427 = vadd.f32 %v2423, %v2426
        %vm2428 = vweird.f32 %v2299
        %vm2429 = vweird.f32 %v2423
        %vm2430 = vmor %vm2428, %vm2429
        %v2431 = vsel %vm2430, %v2423, %v2427
        %v2432 = vand.u32 2147483647, %v2299
        %vm2433 = vcmp.eq.f32.partialorder %v2432, 8.507059e+37
        %v2434 = vand.u32 %v2299, 2147483648
        %v2435 = vor.u32 1.1754944e-38, %v2434
        %v2436 = vsel %vm2433, %v2435, %v2431
        %v2437 = vmul.f32 1.0, %v2436
        %v2438 = vrcp.pop %v2300
        %v2439 = vmul.f32 %v2300, %v2438
        %v2440 = vsub.f32 1.0, %v2439
        %v2441 = vmul.f32 %v2438, %v2440
        %v2442 = vadd.f32 %v2438, %v2441
        %vm2443 = vweird.f32 %v2300
        %vm2444 = vweird.f32 %v2438
        %vm2445 = vmor %vm2443, %vm2444
        %v2446 = vsel %vm2445, %v2438, %v2442
        %v2447 = vand.u32 2147483647, %v2300
        %vm2448 = vcmp.eq.f32.partialorder %v2447, 8.507059e+37
        %v2449 = vand.u32 %v2300, 2147483648
        %v2450 = vor.u32 1.1754944e-38, %v2449
        %v2451 = vsel %vm2448, %v2450, %v2446
        %v2452 = vmul.f32 1.0, %v2451
        %v2453 = vrcp.pop %v2301
        %v2454 = vmul.f32 %v2301, %v2453
        %v2455 = vsub.f32 1.0, %v2454
        %v2456 = vmul.f32 %v2453, %v2455
        %v2457 = vadd.f32 %v2453, %v2456
        %vm2458 = vweird.f32 %v2301
        %vm2459 = vweird.f32 %v2453
        %vm2460 = vmor %vm2458, %vm2459
        %v2461 = vsel %vm2460, %v2453, %v2457
        %v2462 = vand.u32 2147483647, %v2301
        %vm2463 = vcmp.eq.f32.partialorder %v2462, 8.507059e+37
        %v2464 = vand.u32 %v2301, 2147483648
        %v2465 = vor.u32 1.1754944e-38, %v2464
        %v2466 = vsel %vm2463, %v2465, %v2461
        %v2467 = vmul.f32 1.0, %v2466
        %v2468 = vrcp.pop %v2302
        %v2469 = vmul.f32 %v2302, %v2468
        %v2470 = vsub.f32 1.0, %v2469
        %v2471 = vmul.f32 %v2468, %v2470
        %v2472 = vadd.f32 %v2468, %v2471
        %vm2473 = vweird.f32 %v2302
        %vm2474 = vweird.f32 %v2468
        %vm2475 = vmor %vm2473, %vm2474
        %v2476 = vsel %vm2475, %v2468, %v2472
        %v2477 = vand.u32 2147483647, %v2302
        %vm2478 = vcmp.eq.f32.partialorder %v2477, 8.507059e+37
        %v2479 = vand.u32 %v2302, 2147483648
        %v2480 = vor.u32 1.1754944e-38, %v2479
        %v2481 = vsel %vm2478, %v2480, %v2476
        %v2482 = vmul.f32 1.0, %v2481
        %v2483 = vtanh.pop %v2251
        %v2484 = vtanh.pop %v2252
        %v2485 = vtanh.pop %v2253
        %v2486 = vtanh.pop %v2254
        %v2487 = vld [vmem:[%s275] sm:$0xff]
        %v2488 = vld [vmem:[%s275 + $0x8] sm:$0xff]
        %v2489 = vld [vmem:[%s275 + $0x10] sm:$0xff]
        %v2490 = vld [vmem:[%s275 + $0x18] sm:$0xff]
        %v2491 = vmul.f32 %v2377, %v2487
        %v2492 = vmul.f32 %v2392, %v2488
        %v2493 = vmul.f32 %v2407, %v2489
        %v2494 = vmul.f32 %v2422, %v2490
        %v2495 = vmul.f32 %v2317, %v2483
        %v2496 = vmul.f32 %v2332, %v2484
        %v2497 = vmul.f32 %v2347, %v2485
        %v2498 = vmul.f32 %v2362, %v2486
        %v2499 = vadd.f32 %v2491, %v2495
        %v2500 = vadd.f32 %v2492, %v2496
        %v2501 = vadd.f32 %v2493, %v2497
        %v2502 = vadd.f32 %v2494, %v2498
        %v2503 = vtanh.pop %v2499
        %v2504 = vtanh.pop %v2500
        %v2505 = vtanh.pop %v2501
        %v2506 = vtanh.pop %v2502
        %v2507 = vmul.f32 %v2437, %v2503
        %v2508 = vmul.f32 %v2452, %v2504
        %v2509 = vmul.f32 %v2467, %v2505
        %v2510 = vmul.f32 %v2482, %v2506
        %2511 = vst [vmem:[%s301] sm:$0xff] %v2507
        %2512 = vst [vmem:[%s301 + $0x8] sm:$0xff] %v2508
        %2513 = vst [vmem:[%s301 + $0x10] sm:$0xff] %v2509
        %2514 = vst [vmem:[%s301 + $0x18] sm:$0xff] %v2510
        %2515 = vst [vmem:[%s307] sm:$0xff] %v2499
        %2516 = vst [vmem:[%s307 + $0x8] sm:$0xff] %v2500
        %2517 = vst [vmem:[%s307 + $0x10] sm:$0xff] %v2501
        %2518 = vst [vmem:[%s307 + $0x18] sm:$0xff] %v2502
        %s2519 = sand.u32 %s135, 1
        %s2520 = sand.u32 %s135, 1
        %s2521 = smul.addr %s2520, 32
        %s2522 = scalar_lea.vmem [#allocation4], %s2521
        %s2523 = sand.u32 %s163, 1
        %s2524 = sand.u32 %s163, 1
        %s2525 = smul.addr %s2524, 32
        %s2526 = scalar_lea.vmem [#allocation5], %s2525
        // Predicated region
        $region75: #{convlstm_cell_forward.1} parent=69 // pred_check
          %p2527 = pneg %p145
        $region76: #{convlstm_cell_forward.1} parent=69 // pred_check_branch
          %2529 = sbr.rel (%p2527) target = $region78
        $region77: #{convlstm_cell_forward.1} parent=69 // pred_region
          %s2530 = smul.addr %s21, 8
          %s2531 = sadd.s32 %s22, %s2530
          %s2532 = smul.addr %s2531, 8
          %s2533 = scalar_lea.vmem %s4, %s2532
          // Predicated region
          $region79: #{convlstm_cell_forward.1} parent=77 // pred_check
            _
          $region80: #{convlstm_cell_forward.1} parent=77 // pred_check_branch
            %2535 = sbr.rel (0) target = $region82
          $region81: #{convlstm_cell_forward.1} parent=77 // pred_region
            // Predicated region
            $region83: #{convlstm_cell_forward.1} parent=81 // pred_check
              _
            $region84: #{convlstm_cell_forward.1} parent=81 // pred_check_branch
              %2537 = sbr.rel (0) target = $region86
            $region85: #{convlstm_cell_forward.1} parent=81 // pred_region
              // Predicated region
              $region98: #{convlstm_cell_forward.1} parent=85 // pred_check
                _
              $region99: #{convlstm_cell_forward.1} parent=85 // pred_check_branch
                %2559 = sbr.rel (0) target = $region101
              $region100: #{convlstm_cell_forward.1} parent=85 // pred_region
                loop: start=0, step=1, limit=1
                $region102: #{convlstm_cell_forward.1} parent=100 // loop_pre_header
                  _
                $region103: #{convlstm_cell_forward.1} parent=100 // loop_header
                  %s2561 = sphi 0, %s2565
                  %p2562 = scmp.ge.s32.totalorder %s2561, 1
                  %s2566 = sphi %s2522, %s2522
                  %s2567 = sphi %s2533, %s2533
                $region104: #{convlstm_cell_forward.1} parent=100 // loop_header_branch
                  %2564 = sbr.rel (%p2562) target = $region108
                $region105: #{convlstm_cell_forward.1} parent=100 // loop_body
                  %v2568 = vld [vmem:[%s2566] sm:$0xff]
                  %2569 = vst [vmem:[%s2567] sm:$0xff] %v2568
                  %v2570 = vld [vmem:[%s2566 + $0x8] sm:$0xff]
                  %2571 = vst [vmem:[%s2567 + $0x10] sm:$0xff] %v2570
                  %v2572 = vld [vmem:[%s2566 + $0x10] sm:$0xff]
                  %2573 = vst [vmem:[%s2567 + $0x20] sm:$0xff] %v2572
                  %v2574 = vld [vmem:[%s2566 + $0x18] sm:$0xff]
                  %2575 = vst [vmem:[%s2567 + $0x30] sm:$0xff] %v2574
                $region106: #{convlstm_cell_forward.1} parent=100 // loop_footer
                  %s2565 = sadd.s32 1, %s2561
                $region107: #{convlstm_cell_forward.1} parent=100 // loop_footer_branch
                  %2560 = sbr.rel target = $region103
                $region108: #{convlstm_cell_forward.1} parent=100 // loop_exit
                  _
              $region101: #{convlstm_cell_forward.1} parent=85 // pred_fallthru
                _
              // Predicated region
              $region109: #{convlstm_cell_forward.1} parent=85 // pred_check
                _
              $region110: #{convlstm_cell_forward.1} parent=85 // pred_check_branch
                %2577 = sbr.rel target = $region112
              $region111: #{convlstm_cell_forward.1} parent=85 // pred_region
                _
              $region112: #{convlstm_cell_forward.1} parent=85 // pred_fallthru
                _
            $region86: #{convlstm_cell_forward.1} parent=81 // pred_fallthru
              _
            // Predicated region
            $region87: #{convlstm_cell_forward.1} parent=81 // pred_check
              _
            $region88: #{convlstm_cell_forward.1} parent=81 // pred_check_branch
              %2539 = sbr.rel target = $region90
            $region89: #{convlstm_cell_forward.1} parent=81 // pred_region
              %s2541 = ssub.s32 256, 1
              loop: start=0, step=1, limit=1
              $region91: #{convlstm_cell_forward.1} parent=89 // loop_pre_header
                _
              $region92: #{convlstm_cell_forward.1} parent=89 // loop_header
                %s2543 = sphi 0, %s2547
                %p2544 = scmp.ge.s32.totalorder %s2543, 1
                %s2548 = sphi %s2522, %s2522
                %s2549 = sphi %s2533, %s2533
              $region93: #{convlstm_cell_forward.1} parent=89 // loop_header_branch
                %2546 = sbr.rel (%p2544) target = $region97
              $region94: #{convlstm_cell_forward.1} parent=89 // loop_body
                %v2550 = vld [vmem:[%s2548] sm:%s2541]
                %2551 = vst [vmem:[%s2549] sm:%s2541] %v2550
                %v2552 = vld [vmem:[%s2548 + $0x8] sm:%s2541]
                %2553 = vst [vmem:[%s2549 + $0x10] sm:%s2541] %v2552
                %v2554 = vld [vmem:[%s2548 + $0x10] sm:%s2541]
                %2555 = vst [vmem:[%s2549 + $0x20] sm:%s2541] %v2554
                %v2556 = vld [vmem:[%s2548 + $0x18] sm:%s2541]
                %2557 = vst [vmem:[%s2549 + $0x30] sm:%s2541] %v2556
              $region95: #{convlstm_cell_forward.1} parent=89 // loop_footer
                %s2547 = sadd.s32 1, %s2543
              $region96: #{convlstm_cell_forward.1} parent=89 // loop_footer_branch
                %2542 = sbr.rel target = $region92
              $region97: #{convlstm_cell_forward.1} parent=89 // loop_exit
                _
            $region90: #{convlstm_cell_forward.1} parent=81 // pred_fallthru
              _
          $region82: #{convlstm_cell_forward.1} parent=77 // pred_fallthru
            _
          %2578 = vnop
        $region78: #{convlstm_cell_forward.1} parent=69 // pred_fallthru
          _
        // Predicated region
        $region113: #{convlstm_cell_forward.1} parent=69 // pred_check
          %p2579 = pneg %p173
        $region114: #{convlstm_cell_forward.1} parent=69 // pred_check_branch
          %2581 = sbr.rel (%p2579) target = $region116
        $region115: #{convlstm_cell_forward.1} parent=69 // pred_region
          %s2582 = smul.addr %s21, 8
          %s2583 = sadd.s32 %s22, %s2582
          %s2584 = smul.addr %s2583, 8
          %s2585 = scalar_lea.vmem %s5, %s2584
          // Predicated region
          $region117: #{convlstm_cell_forward.1} parent=115 // pred_check
            _
          $region118: #{convlstm_cell_forward.1} parent=115 // pred_check_branch
            %2587 = sbr.rel (0) target = $region120
          $region119: #{convlstm_cell_forward.1} parent=115 // pred_region
            // Predicated region
            $region121: #{convlstm_cell_forward.1} parent=119 // pred_check
              _
            $region122: #{convlstm_cell_forward.1} parent=119 // pred_check_branch
              %2589 = sbr.rel (0) target = $region124
            $region123: #{convlstm_cell_forward.1} parent=119 // pred_region
              // Predicated region
              $region136: #{convlstm_cell_forward.1} parent=123 // pred_check
                _
              $region137: #{convlstm_cell_forward.1} parent=123 // pred_check_branch
                %2611 = sbr.rel (0) target = $region139
              $region138: #{convlstm_cell_forward.1} parent=123 // pred_region
                loop: start=0, step=1, limit=1
                $region140: #{convlstm_cell_forward.1} parent=138 // loop_pre_header
                  _
                $region141: #{convlstm_cell_forward.1} parent=138 // loop_header
                  %s2613 = sphi 0, %s2617
                  %p2614 = scmp.ge.s32.totalorder %s2613, 1
                  %s2618 = sphi %s2526, %s2526
                  %s2619 = sphi %s2585, %s2585
                $region142: #{convlstm_cell_forward.1} parent=138 // loop_header_branch
                  %2616 = sbr.rel (%p2614) target = $region146
                $region143: #{convlstm_cell_forward.1} parent=138 // loop_body
                  %v2620 = vld [vmem:[%s2618] sm:$0xff]
                  %2621 = vst [vmem:[%s2619] sm:$0xff] %v2620
                  %v2622 = vld [vmem:[%s2618 + $0x8] sm:$0xff]
                  %2623 = vst [vmem:[%s2619 + $0x10] sm:$0xff] %v2622
                  %v2624 = vld [vmem:[%s2618 + $0x10] sm:$0xff]
                  %2625 = vst [vmem:[%s2619 + $0x20] sm:$0xff] %v2624
                  %v2626 = vld [vmem:[%s2618 + $0x18] sm:$0xff]
                  %2627 = vst [vmem:[%s2619 + $0x30] sm:$0xff] %v2626
                $region144: #{convlstm_cell_forward.1} parent=138 // loop_footer
                  %s2617 = sadd.s32 1, %s2613
                $region145: #{convlstm_cell_forward.1} parent=138 // loop_footer_branch
                  %2612 = sbr.rel target = $region141
                $region146: #{convlstm_cell_forward.1} parent=138 // loop_exit
                  _
              $region139: #{convlstm_cell_forward.1} parent=123 // pred_fallthru
                _
              // Predicated region
              $region147: #{convlstm_cell_forward.1} parent=123 // pred_check
                _
              $region148: #{convlstm_cell_forward.1} parent=123 // pred_check_branch
                %2629 = sbr.rel target = $region150
              $region149: #{convlstm_cell_forward.1} parent=123 // pred_region
                _
              $region150: #{convlstm_cell_forward.1} parent=123 // pred_fallthru
                _
            $region124: #{convlstm_cell_forward.1} parent=119 // pred_fallthru
              _
            // Predicated region
            $region125: #{convlstm_cell_forward.1} parent=119 // pred_check
              _
            $region126: #{convlstm_cell_forward.1} parent=119 // pred_check_branch
              %2591 = sbr.rel target = $region128
            $region127: #{convlstm_cell_forward.1} parent=119 // pred_region
              %s2593 = ssub.s32 256, 1
              loop: start=0, step=1, limit=1
              $region129: #{convlstm_cell_forward.1} parent=127 // loop_pre_header
                _
              $region130: #{convlstm_cell_forward.1} parent=127 // loop_header
                %s2595 = sphi 0, %s2599
                %p2596 = scmp.ge.s32.totalorder %s2595, 1
                %s2600 = sphi %s2526, %s2526
                %s2601 = sphi %s2585, %s2585
              $region131: #{convlstm_cell_forward.1} parent=127 // loop_header_branch
                %2598 = sbr.rel (%p2596) target = $region135
              $region132: #{convlstm_cell_forward.1} parent=127 // loop_body
                %v2602 = vld [vmem:[%s2600] sm:%s2593]
                %2603 = vst [vmem:[%s2601] sm:%s2593] %v2602
                %v2604 = vld [vmem:[%s2600 + $0x8] sm:%s2593]
                %2605 = vst [vmem:[%s2601 + $0x10] sm:%s2593] %v2604
                %v2606 = vld [vmem:[%s2600 + $0x10] sm:%s2593]
                %2607 = vst [vmem:[%s2601 + $0x20] sm:%s2593] %v2606
                %v2608 = vld [vmem:[%s2600 + $0x18] sm:%s2593]
                %2609 = vst [vmem:[%s2601 + $0x30] sm:%s2593] %v2608
              $region133: #{convlstm_cell_forward.1} parent=127 // loop_footer
                %s2599 = sadd.s32 1, %s2595
              $region134: #{convlstm_cell_forward.1} parent=127 // loop_footer_branch
                %2594 = sbr.rel target = $region130
              $region135: #{convlstm_cell_forward.1} parent=127 // loop_exit
                _
            $region128: #{convlstm_cell_forward.1} parent=119 // pred_fallthru
              _
          $region120: #{convlstm_cell_forward.1} parent=115 // pred_fallthru
            _
          %2630 = vnop
        $region116: #{convlstm_cell_forward.1} parent=69 // pred_fallthru
          _
      $region70: #{convlstm_cell_forward.1} parent=5 // pred_fallthru
        _
      %p2631 = scmp.le.s32.totalorder 2, %s12
      // Predicated region
      $region151: #{convlstm_cell_forward.1} parent=5 // pred_check
        %p2632 = pneg %p2631
      $region152: #{convlstm_cell_forward.1} parent=5 // pred_check_branch
        %2634 = sbr.rel (%p2632) target = $region154
      $region153: #{convlstm_cell_forward.1} parent=5 // pred_region
        %s2635 = ssub.s32 %s12, 2
        // Predicated region
        $region155: #{convlstm_cell_forward.1} parent=153 // pred_check
          %p2636 = pneg %p151
        $region156: #{convlstm_cell_forward.1} parent=153 // pred_check_branch
          %2638 = sbr.rel (%p2636) target = $region158
        $region157: #{convlstm_cell_forward.1} parent=153 // pred_region
          %s2639 = sand.u32 %s136, 1
          %s2640 = sand.u32 %s136, 1
          %s2641 = smul.addr %s2640, 32
          %s2642 = scalar_lea.vmem [#allocation4], %s2641
        $region158: #{convlstm_cell_forward.1} parent=153 // pred_fallthru
          _
        // Predicated region
        $region159: #{convlstm_cell_forward.1} parent=153 // pred_check
          %p2643 = pneg %p179
        $region160: #{convlstm_cell_forward.1} parent=153 // pred_check_branch
          %2645 = sbr.rel (%p2643) target = $region162
        $region161: #{convlstm_cell_forward.1} parent=153 // pred_region
          %s2646 = sand.u32 %s164, 1
          %s2647 = sand.u32 %s164, 1
          %s2648 = smul.addr %s2647, 32
          %s2649 = scalar_lea.vmem [#allocation5], %s2648
        $region162: #{convlstm_cell_forward.1} parent=153 // pred_fallthru
          _
      $region154: #{convlstm_cell_forward.1} parent=5 // pred_fallthru
        _
    $region6: #{convlstm_cell_forward.1} parent=1 // loop_footer
      %s16 = sadd.s32 1, %s12
    $region7: #{convlstm_cell_forward.1} parent=1 // loop_footer_branch
      %11 = sbr.rel target = $region3
    $region8: #{convlstm_cell_forward.1} parent=1 // loop_exit
      _

</llo_original>
